<compile_context>
chip_gen: v7x
topology: tpu7x:2x2x1
jax: 0.10.0
libtpu: 0.0.40
codegen_flags: <defaults>
</compile_context>

<pallas_src>
import functools

import jax
import jax.numpy as jnp
from jax.experimental import pallas as pl
from jax.experimental.pallas import tpu as pltpu

EPS = 1e-5          # nn.LayerNorm default eps
NUM_HEADS = 4


def _layer_norm(v, w, b):
    mu = jnp.mean(v, axis=-1, keepdims=True)
    var = jnp.mean(jnp.square(v - mu), axis=-1, keepdims=True)
    return (v - mu) * jax.lax.rsqrt(var + EPS) * w + b


def _gelu_tanh(x):
    # tanh-approximation GELU (|err| vs exact erf GELU ~1e-3, well inside the 1e-2 tolerance);
    # tanh lowers to the EUP slot, keeping the VALU free.  Switch to the erf form if a
    # tighter tolerance is ever required.
    c = 0.7978845608028654  # sqrt(2/pi)
    return 0.5 * x * (1.0 + jnp.tanh(c * (x + 0.044715 * x * x * x)))


def self_attention_kernel(x_ref, ln_w_ref, ln_b_ref,
                          w_proj_ref, proj_b_ref, bo_ref,
                          ln2_w_ref, ln2_b_ref, w1_ref, b1_ref, w2_ref, b2_ref,
                          o_ref, *, num_heads, seq_len):
    H, S = num_heads, seq_len
    R, C = x_ref.shape                        # R = bb * S token rows in this block
    bb = R // S
    HC = H * C
    cd = w_proj_ref.dtype                     # matmul operand dtype (f32; bf16 if use_bf16)

    x = x_ref[...]                                                  # (R, C) full-block load
    x_ln = _layer_norm(x, ln_w_ref[0], ln_b_ref[0])
    x_mm = x_ln.astype(cd)

    # ONE lane-dense projection for all heads and all rows (f32 accumulation):
    #   cols [0, HC)    : t_h  = x_ln @ A_h  + c_h   with A_h = Wq_h^T Wk_h / sqrt(hd)
    #   cols [HC, 2*HC) : v'_h = x_ln @ VO_h + d_h   with VO_h = Wv_h^T Wo_h^T
    proj = jnp.dot(x_mm, w_proj_ref[...],
                   preferred_element_type=jnp.float32) + proj_b_ref[0]      # (R, 2*H*C)

    attn_rows = []
    for b in range(bb):                       # static unroll; bb is 1 or a small (<=8) fold
        r0 = b * S
        xb = x_mm[r0:r0 + S, :]               # (S, C)   post-LN keys / values source
        tb = proj[r0:r0 + S, :HC]             # (S, H*C) per-head query terms (static slices)
        vb = proj[r0:r0 + S, HC:]             # (S, H*C) per-head fused V*Wo values

        # per-head scores s_h = t_h @ xb^T (dot_general contracting last dims; no transposes),
        # then ONE softmax chain over the (H, S, S) stack; divide on the EUP slot.
        s3 = jnp.stack(
            [jax.lax.dot_general(tb[:, h * C:(h + 1) * C].astype(cd), xb,
                                 (((1,), (1,)), ((), ())),
                                 preferred_element_type=jnp.float32)
             for h in range(H)], axis=0)                                    # (H, S, S)
        s3 = s3 - jnp.max(s3, axis=-1, keepdims=True)
        e3 = jnp.exp(s3)
        p3 = e3 * pl.reciprocal(jnp.sum(e3, axis=-1, keepdims=True), approx=True)

        # Fuse the PV matmul with the cross-head sum:
        #   p (H,S,S) -> (S, H*S)  (hqk->qhk relayout via per-head slice + lane concat, XLU)
        #   v (S,H*C) -> (H*S, C)  (sublane concat of per-head lane slices)
        # then a single (S, H*S) @ (H*S, C) matmul: the head-sum is the K=H*S contraction.
        p_cat = jnp.concatenate([p3[h] for h in range(H)], axis=1)          # (S, H*S)
        v_stk = jnp.concatenate([vb[:, h * C:(h + 1) * C] for h in range(H)], axis=0)
        attn_rows.append(jnp.dot(p_cat.astype(cd), v_stk.astype(cd),
                                 preferred_element_type=jnp.float32))       # (S, C)

    attn = attn_rows[0] if bb == 1 else jnp.concatenate(attn_rows, axis=0)  # (R, C)
    att = attn + bo_ref[0] + x                # residual 1 (out-proj bias added once per row)

    # feed-forward block on the full (R, C) row slab: LN -> Linear -> GELU -> Linear, residual
    h = _layer_norm(att, ln2_w_ref[0], ln2_b_ref[0])
    h = jnp.dot(h.astype(cd), w1_ref[...], preferred_element_type=jnp.float32) + b1_ref[0]
    h = _gelu_tanh(h)
    h = jnp.dot(h.astype(cd), w2_ref[...], preferred_element_type=jnp.float32) + b2_ref[0]

    o_ref[...] = (h + att).astype(o_ref.dtype)


def _device_kind():
    try:
        return jax.devices()[0].device_kind.lower()
    except Exception:
        return ""


def _single_tc_chip(kind):
    """Single-TensorCore chips (v5e / v6e): fold the batch into one block so LN / projection /
    FFN matmuls run on (B*S, C) rows.  Dual-TC v7x and megacore v4/v5p keep the batch grid."""
    return any(t in kind for t in ("v5 lite", "v5e", "v6 lite", "v6e"))


def _grid_semantics(grid, kind):
    """(preferred, fallback) dimension_semantics for the batch grid axis."""
    if grid[0] == 1:
        return ("arbitrary",), ("arbitrary",)
    if "v7" in kind:
        core_par = getattr(pltpu, "CORE_PARALLEL", None)
        if core_par is not None:
            # make sure the batch axis genuinely shards across the two v7x TensorCores
            return (core_par,), ("parallel",)
    return ("parallel",), ("parallel",)


def self_attention_forward(x_nchw, params, num_heads=NUM_HEADS,
                           fold_batch=None, use_bf16=False):
    B, C, H, W = x_nchw.shape
    assert C % num_heads == 0
    S = H * W
    hd = C // num_heads
    # token-major 2D slab (B*S, C): kernel load/store is a straight full-block access
    x_rows = x_nchw.reshape(B, C, S).transpose(0, 2, 1).reshape(B * S, C)

    # ---- one-time offline weight folding (plain-JAX glue, outside the kernel) ----
    w_in, b_in = params["in_proj_w"], params["in_proj_b"]
    wq, wk, wv = w_in[:C], w_in[C:2 * C], w_in[2 * C:]
    bq, bv = b_in[:C], b_in[2 * C:]      # key bias only shifts score rows -> softmax-invariant
    wo, bo = params["out_proj_w"], params["out_proj_b"]
    scale = 1.0 / (hd ** 0.5)

    a_l, c_l, vo_l, d_l = [], [], [], []
    for h in range(num_heads):
        sl = slice(h * hd, (h + 1) * hd)
        wq_h, wk_h, wv_h, wo_h = wq[sl], wk[sl], wv[sl], wo[:, sl]
        a_l.append((wq_h.T @ wk_h) * scale)      # (C, C): scores = x_ln A_h x_ln^T
        c_l.append((bq[sl] @ wk_h) * scale)      # (C,)  : query-bias row term
        vo_l.append(wv_h.T @ wo_h.T)             # (C, C): V proj fused with out proj
        d_l.append(bv[sl] @ wo_h.T)              # (C,)

    # lane-concatenate the folds: one (C, 2*H*C) projection slab + one (1, 2*H*C) bias row
    w_proj = jnp.concatenate(
        [jnp.concatenate(a_l, axis=1), jnp.concatenate(vo_l, axis=1)], axis=1)
    proj_b = jnp.concatenate(c_l + d_l).reshape(1, -1).astype(jnp.float32)

    w1_t, w2_t = params["fc1_w"].T, params["fc2_w"].T
    mm_dtype = jnp.bfloat16 if use_bf16 else jnp.float32     # bf16 = v7x/v6e lever if C/S grow
    w_proj, w1_t, w2_t = (w.astype(mm_dtype) for w in (w_proj, w1_t, w2_t))
    row = lambda v: v.reshape(1, -1).astype(jnp.float32)

    kind = _device_kind()
    if fold_batch is None:
        fold_batch = _single_tc_chip(kind)
    # cap the in-kernel static batch unroll; larger B falls back to the per-batch grid axis
    bb = B if (fold_batch and B <= 8) else 1
    grid = (B // bb,)

    def full(shape):
        n = len(shape)
        return pl.BlockSpec(shape, lambda b: (0,) * n)       # VMEM-resident across grid steps

    kernel = functools.partial(self_attention_kernel, num_heads=num_heads, seq_len=S)

    in_specs = [
        pl.BlockSpec((bb * S, C), lambda b: (b, 0)),          # x token rows
        full((1, C)), full((1, C)),                           # ln1 weight / bias
        full((C, 2 * num_heads * C)),                         # W_proj = [A_cat | VO_cat]
        full((1, 2 * num_heads * C)),                         # its bias row [c_cat | d_cat]
        full((1, C)),                                         # out-proj bias
        full((1, C)), full((1, C)),                           # ln2 weight / bias
        full((C, C)), full((1, C)),                           # fc1 W^T / bias
        full((C, C)), full((1, C)),                           # fc2 W^T / bias
    ]
    args = (x_rows,
            row(params["ln_w"]), row(params["ln_b"]),
            w_proj, proj_b, row(bo),
            row(params["ln2_w"]), row(params["ln2_b"]),
            w1_t, row(params["fc1_b"]),
            w2_t, row(params["fc2_b"]))

    def call(dim_sems):
        return pl.pallas_call(
            kernel,
            out_shape=jax.ShapeDtypeStruct((B * S, C), x_rows.dtype),
            grid=grid,
            in_specs=in_specs,
            out_specs=pl.BlockSpec((bb * S, C), lambda b: (b, 0)),
            compiler_params=pltpu.CompilerParams(dimension_semantics=dim_sems),
        )(*args)

    preferred, fallback = _grid_semantics(grid, kind)
    try:
        out_rows = call(preferred)
    except Exception:
        if preferred == fallback:
            raise
        out_rows = call(fallback)        # CORE_PARALLEL unsupported -> plain parallel grid

    return out_rows.reshape(B, S, C).transpose(0, 2, 1).reshape(B, C, H, W)


def self_attention_reference(x_nchw, params, num_heads=NUM_HEADS):
    """Pure-JAX reference mirroring the PyTorch module (exact erf GELU, exact softmax)."""
    B, C, H, W = x_nchw.shape
    S = H * W
    x = x_nchw.reshape(B, C, S).transpose(0, 2, 1)
    x_ln = _layer_norm(x, params["ln_w"], params["ln_b"])
    qkv = x_ln @ params["in_proj_w"].T + params["in_proj_b"]
    q, k, v = jnp.split(qkv, 3, axis=-1)
    hd = C // num_heads
    sh = lambda t: t.reshape(B, S, num_heads, hd).transpose(0, 2, 1, 3)
    qh, kh, vh = sh(q), sh(k), sh(v)
    s = jnp.einsum("bhqd,bhkd->bhqk", qh, kh) / jnp.sqrt(float(hd))
    p = jax.nn.softmax(s, axis=-1)
    o = jnp.einsum("bhqk,bhkd->bhqd", p, vh).transpose(0, 2, 1, 3).reshape(B, S, C)
    o = o @ params["out_proj_w"].T + params["out_proj_b"]
    att = o + x
    h = _layer_norm(att, params["ln2_w"], params["ln2_b"])
    h = h @ params["fc1_w"].T + params["fc1_b"]
    h = 0.5 * h * (1.0 + jax.lax.erf(h * 0.7071067811865476))   # exact GELU
    h = h @ params["fc2_w"].T + params["fc2_b"]
    out = h + att
    return out.transpose(0, 2, 1).reshape(B, C, H, W)


def init_params(key, channels):
    ks = jax.random.split(key, 8)
    n = lambda k, shape: (0.1 * jax.random.normal(k, shape, jnp.float32))
    return {
        "ln_w": jnp.ones((channels,), jnp.float32),
        "ln_b": jnp.zeros((channels,), jnp.float32),
        "in_proj_w": n(ks[0], (3 * channels, channels)),
        "in_proj_b": n(ks[1], (3 * channels,)),
        "out_proj_w": n(ks[2], (channels, channels)),
        "out_proj_b": n(ks[3], (channels,)),
        "ln2_w": jnp.ones((channels,), jnp.float32),
        "ln2_b": jnp.zeros((channels,), jnp.float32),
        "fc1_w": n(ks[4], (channels, channels)),
        "fc1_b": n(ks[5], (channels,)),
        "fc2_w": n(ks[6], (channels, channels)),
        "fc2_b": n(ks[7], (channels,)),
    }


if __name__ == "__main__":
    B, C, H, W = 2, 32, 8, 8            # channels must be divisible by num_heads=4
    key = jax.random.PRNGKey(0)
    k_x, k_p = jax.random.split(key)
    x = jax.random.normal(k_x, (B, C, H, W), jnp.float32)
    params = init_params(k_p, C)

    out = self_attention_forward(x, params)
    out = jax.block_until_ready(out)

    ref = jax.block_until_ready(self_attention_reference(x, params))
    assert out.shape == (B, C, H, W)
    assert jnp.allclose(out, ref, atol=1e-2, rtol=1e-2), float(jnp.max(jnp.abs(out - ref)))

    print("KERNEL_OK")
</pallas_src>

<mosaic_0001>
module attributes {stable_mosaic.version = 11 : i64} {
  func.func @self_attention_kernel(%arg0: i32, %arg1: memref<64x32xf32, #tpu.memory_space<vmem>>, %arg2: memref<1x32xf32, #tpu.memory_space<vmem>>, %arg3: memref<1x32xf32, #tpu.memory_space<vmem>>, %arg4: memref<32x256xf32, #tpu.memory_space<vmem>>, %arg5: memref<1x256xf32, #tpu.memory_space<vmem>>, %arg6: memref<1x32xf32, #tpu.memory_space<vmem>>, %arg7: memref<1x32xf32, #tpu.memory_space<vmem>>, %arg8: memref<1x32xf32, #tpu.memory_space<vmem>>, %arg9: memref<32x32xf32, #tpu.memory_space<vmem>>, %arg10: memref<1x32xf32, #tpu.memory_space<vmem>>, %arg11: memref<32x32xf32, #tpu.memory_space<vmem>>, %arg12: memref<1x32xf32, #tpu.memory_space<vmem>>, %arg13: memref<64x32xf32, #tpu.memory_space<vmem>>) attributes {dimension_semantics = [#tpu.dimension_semantics<parallel>], iteration_bounds = array<i64: 2>, scalar_prefetch = 0 : i64, scratch_operands = 0 : i64, tpu.core_type = #tpu.core_type<tc>, window_params = [{transform_indices = @transform_0, window_bounds = array<i64: 64, 32>}, {pipeline_mode = #tpu.pipeline_mode<synchronous>, transform_indices = @transform_1, window_bounds = array<i64: 1, 32>}, {pipeline_mode = #tpu.pipeline_mode<synchronous>, transform_indices = @transform_2, window_bounds = array<i64: 1, 32>}, {pipeline_mode = #tpu.pipeline_mode<synchronous>, transform_indices = @transform_3, window_bounds = array<i64: 32, 256>}, {pipeline_mode = #tpu.pipeline_mode<synchronous>, transform_indices = @transform_4, window_bounds = array<i64: 1, 256>}, {pipeline_mode = #tpu.pipeline_mode<synchronous>, transform_indices = @transform_5, window_bounds = array<i64: 1, 32>}, {pipeline_mode = #tpu.pipeline_mode<synchronous>, transform_indices = @transform_6, window_bounds = array<i64: 1, 32>}, {pipeline_mode = #tpu.pipeline_mode<synchronous>, transform_indices = @transform_7, window_bounds = array<i64: 1, 32>}, {pipeline_mode = #tpu.pipeline_mode<synchronous>, transform_indices = @transform_8, window_bounds = array<i64: 32, 32>}, {pipeline_mode = #tpu.pipeline_mode<synchronous>, transform_indices = @transform_9, window_bounds = array<i64: 1, 32>}, {pipeline_mode = #tpu.pipeline_mode<synchronous>, transform_indices = @transform_10, window_bounds = array<i64: 32, 32>}, {pipeline_mode = #tpu.pipeline_mode<synchronous>, transform_indices = @transform_11, window_bounds = array<i64: 1, 32>}, {transform_indices = @transform_12, window_bounds = array<i64: 64, 32>}]} {
    %c0 = arith.constant 0 : index
    %c0_0 = arith.constant 0 : index
    %0 = vector.load %arg1[%c0, %c0_0] : memref<64x32xf32, #tpu.memory_space<vmem>>, vector<64x32xf32>
    %c0_1 = arith.constant 0 : index
    %c0_2 = arith.constant 0 : index
    %1 = vector.load %arg2[%c0_1, %c0_2] : memref<1x32xf32, #tpu.memory_space<vmem>>, vector<1x32xf32>
    %2 = vector.shape_cast %1 : vector<1x32xf32> to vector<32xf32>
    %c0_3 = arith.constant 0 : index
    %c0_4 = arith.constant 0 : index
    %3 = vector.load %arg3[%c0_3, %c0_4] : memref<1x32xf32, #tpu.memory_space<vmem>>, vector<1x32xf32>
    %4 = vector.shape_cast %3 : vector<1x32xf32> to vector<32xf32>
    %cst = arith.constant dense<0.000000e+00> : vector<64xf32>
    %5 = vector.multi_reduction <add>, %0, %cst [1] : vector<64x32xf32> to vector<64xf32>
    %6 = vector.shape_cast %5 : vector<64xf32> to vector<64x1xf32>
    %cst_5 = arith.constant 3.200000e+01 : f32
    %7 = vector.broadcast %cst_5 : f32 to vector<64x1xf32>
    %8 = arith.divf %6, %7 : vector<64x1xf32>
    %9 = vector.broadcast %8 : vector<64x1xf32> to vector<64x32xf32>
    %10 = arith.subf %0, %9 : vector<64x32xf32>
    %11 = arith.mulf %10, %10 : vector<64x32xf32>
    %cst_6 = arith.constant dense<0.000000e+00> : vector<64xf32>
    %12 = vector.multi_reduction <add>, %11, %cst_6 [1] : vector<64x32xf32> to vector<64xf32>
    %13 = vector.shape_cast %12 : vector<64xf32> to vector<64x1xf32>
    %cst_7 = arith.constant 3.200000e+01 : f32
    %14 = vector.broadcast %cst_7 : f32 to vector<64x1xf32>
    %15 = arith.divf %13, %14 : vector<64x1xf32>
    %16 = vector.broadcast %8 : vector<64x1xf32> to vector<64x32xf32>
    %17 = arith.subf %0, %16 : vector<64x32xf32>
    %cst_8 = arith.constant 9.99999974E-6 : f32
    %18 = vector.broadcast %cst_8 : f32 to vector<64x1xf32>
    %19 = arith.addf %15, %18 : vector<64x1xf32>
    %20 = math.rsqrt %19 : vector<64x1xf32>
    %21 = vector.broadcast %20 : vector<64x1xf32> to vector<64x32xf32>
    %22 = arith.mulf %17, %21 : vector<64x32xf32>
    %23 = vector.shape_cast %2 : vector<32xf32> to vector<1x32xf32>
    %24 = vector.broadcast %23 : vector<1x32xf32> to vector<64x32xf32>
    %25 = arith.mulf %22, %24 : vector<64x32xf32>
    %26 = vector.shape_cast %4 : vector<32xf32> to vector<1x32xf32>
    %27 = vector.broadcast %26 : vector<1x32xf32> to vector<64x32xf32>
    %28 = arith.addf %25, %27 : vector<64x32xf32>
    %c0_9 = arith.constant 0 : index
    %c0_10 = arith.constant 0 : index
    %29 = vector.load %arg4[%c0_9, %c0_10] : memref<32x256xf32, #tpu.memory_space<vmem>>, vector<32x256xf32>
    %cst_11 = arith.constant dense<0.000000e+00> : vector<64x256xf32>
    %30 = tpu.matmul %28, %29, %cst_11 {dimension_numbers = #tpu.dot_dimension_numbers<[1], [0], [0], [1], [0, 0, 1, 1], [], []>} : vector<64x32xf32>, vector<32x256xf32>, vector<64x256xf32> -> vector<64x256xf32>
    %c0_12 = arith.constant 0 : index
    %c0_13 = arith.constant 0 : index
    %31 = vector.load %arg5[%c0_12, %c0_13] : memref<1x256xf32, #tpu.memory_space<vmem>>, vector<1x256xf32>
    %32 = vector.shape_cast %31 : vector<1x256xf32> to vector<256xf32>
    %33 = vector.shape_cast %32 : vector<256xf32> to vector<1x256xf32>
    %34 = vector.broadcast %33 : vector<1x256xf32> to vector<64x256xf32>
    %35 = arith.addf %30, %34 : vector<64x256xf32>
    %36 = vector.extract_strided_slice %35 {offsets = [0, 0], sizes = [64, 128], strides = [1, 1]} : vector<64x256xf32> to vector<64x128xf32>
    %37 = vector.extract_strided_slice %35 {offsets = [0, 128], sizes = [64, 128], strides = [1, 1]} : vector<64x256xf32> to vector<64x128xf32>
    %38 = vector.extract_strided_slice %36 {offsets = [0, 0], sizes = [64, 32], strides = [1, 1]} : vector<64x128xf32> to vector<64x32xf32>
    %cst_14 = arith.constant dense<0.000000e+00> : vector<64x64xf32>
    %39 = tpu.matmul %38, %28, %cst_14 {dimension_numbers = #tpu.dot_dimension_numbers<[1], [1], [0], [0], [0, 0, 1, 0], [], []>} : vector<64x32xf32>, vector<64x32xf32>, vector<64x64xf32> -> vector<64x64xf32>
    %40 = vector.extract_strided_slice %36 {offsets = [0, 32], sizes = [64, 32], strides = [1, 1]} : vector<64x128xf32> to vector<64x32xf32>
    %cst_15 = arith.constant dense<0.000000e+00> : vector<64x64xf32>
    %41 = tpu.matmul %40, %28, %cst_15 {dimension_numbers = #tpu.dot_dimension_numbers<[1], [1], [0], [0], [0, 0, 1, 0], [], []>} : vector<64x32xf32>, vector<64x32xf32>, vector<64x64xf32> -> vector<64x64xf32>
    %42 = vector.extract_strided_slice %36 {offsets = [0, 64], sizes = [64, 32], strides = [1, 1]} : vector<64x128xf32> to vector<64x32xf32>
    %cst_16 = arith.constant dense<0.000000e+00> : vector<64x64xf32>
    %43 = tpu.matmul %42, %28, %cst_16 {dimension_numbers = #tpu.dot_dimension_numbers<[1], [1], [0], [0], [0, 0, 1, 0], [], []>} : vector<64x32xf32>, vector<64x32xf32>, vector<64x64xf32> -> vector<64x64xf32>
    %44 = vector.extract_strided_slice %36 {offsets = [0, 96], sizes = [64, 32], strides = [1, 1]} : vector<64x128xf32> to vector<64x32xf32>
    %cst_17 = arith.constant dense<0.000000e+00> : vector<64x64xf32>
    %45 = tpu.matmul %44, %28, %cst_17 {dimension_numbers = #tpu.dot_dimension_numbers<[1], [1], [0], [0], [0, 0, 1, 0], [], []>} : vector<64x32xf32>, vector<64x32xf32>, vector<64x64xf32> -> vector<64x64xf32>
    %46 = vector.shape_cast %39 : vector<64x64xf32> to vector<1x64x64xf32>
    %47 = vector.shape_cast %41 : vector<64x64xf32> to vector<1x64x64xf32>
    %48 = vector.shape_cast %43 : vector<64x64xf32> to vector<1x64x64xf32>
    %49 = vector.shape_cast %45 : vector<64x64xf32> to vector<1x64x64xf32>
    %50 = tpu.concatenate %46, %47, %48, %49 in 0 : vector<1x64x64xf32>, vector<1x64x64xf32>, vector<1x64x64xf32>, vector<1x64x64xf32> -> vector<4x64x64xf32>
    %cst_18 = arith.constant dense<0xFF800000> : vector<4x64xf32>
    %51 = vector.multi_reduction <maximumf>, %50, %cst_18 [2] : vector<4x64x64xf32> to vector<4x64xf32>
    %52 = vector.shape_cast %51 : vector<4x64xf32> to vector<4x64x1xf32>
    %53 = vector.broadcast %52 : vector<4x64x1xf32> to vector<4x64x64xf32>
    %54 = arith.subf %50, %53 : vector<4x64x64xf32>
    %55 = math.exp %54 : vector<4x64x64xf32>
    %cst_19 = arith.constant dense<0.000000e+00> : vector<4x64xf32>
    %56 = vector.multi_reduction <add>, %55, %cst_19 [2] : vector<4x64x64xf32> to vector<4x64xf32>
    %57 = vector.shape_cast %56 : vector<4x64xf32> to vector<4x64x1xf32>
    %58 = tpu.reciprocal %57 {approx = true} : vector<4x64x1xf32> -> vector<4x64x1xf32>
    %59 = vector.broadcast %58 : vector<4x64x1xf32> to vector<4x64x64xf32>
    %60 = arith.mulf %55, %59 : vector<4x64x64xf32>
    %61 = vector.extract_strided_slice %60 {offsets = [0, 0, 0], sizes = [1, 64, 64], strides = [1, 1, 1]} : vector<4x64x64xf32> to vector<1x64x64xf32>
    %62 = vector.shape_cast %61 : vector<1x64x64xf32> to vector<64x64xf32>
    %63 = vector.extract_strided_slice %60 {offsets = [1, 0, 0], sizes = [1, 64, 64], strides = [1, 1, 1]} : vector<4x64x64xf32> to vector<1x64x64xf32>
    %64 = vector.shape_cast %63 : vector<1x64x64xf32> to vector<64x64xf32>
    %65 = vector.extract_strided_slice %60 {offsets = [2, 0, 0], sizes = [1, 64, 64], strides = [1, 1, 1]} : vector<4x64x64xf32> to vector<1x64x64xf32>
    %66 = vector.shape_cast %65 : vector<1x64x64xf32> to vector<64x64xf32>
    %67 = vector.extract_strided_slice %60 {offsets = [3, 0, 0], sizes = [1, 64, 64], strides = [1, 1, 1]} : vector<4x64x64xf32> to vector<1x64x64xf32>
    %68 = vector.shape_cast %67 : vector<1x64x64xf32> to vector<64x64xf32>
    %69 = tpu.concatenate %62, %64, %66, %68 in 1 : vector<64x64xf32>, vector<64x64xf32>, vector<64x64xf32>, vector<64x64xf32> -> vector<64x256xf32>
    %70 = vector.extract_strided_slice %37 {offsets = [0, 0], sizes = [64, 32], strides = [1, 1]} : vector<64x128xf32> to vector<64x32xf32>
    %71 = vector.extract_strided_slice %37 {offsets = [0, 32], sizes = [64, 32], strides = [1, 1]} : vector<64x128xf32> to vector<64x32xf32>
    %72 = vector.extract_strided_slice %37 {offsets = [0, 64], sizes = [64, 32], strides = [1, 1]} : vector<64x128xf32> to vector<64x32xf32>
    %73 = vector.extract_strided_slice %37 {offsets = [0, 96], sizes = [64, 32], strides = [1, 1]} : vector<64x128xf32> to vector<64x32xf32>
    %74 = tpu.concatenate %70, %71, %72, %73 in 0 : vector<64x32xf32>, vector<64x32xf32>, vector<64x32xf32>, vector<64x32xf32> -> vector<256x32xf32>
    %cst_20 = arith.constant dense<0.000000e+00> : vector<64x32xf32>
    %75 = tpu.matmul %69, %74, %cst_20 {dimension_numbers = #tpu.dot_dimension_numbers<[1], [0], [0], [1], [0, 0, 1, 1], [], []>} : vector<64x256xf32>, vector<256x32xf32>, vector<64x32xf32> -> vector<64x32xf32>
    %c0_21 = arith.constant 0 : index
    %c0_22 = arith.constant 0 : index
    %76 = vector.load %arg6[%c0_21, %c0_22] : memref<1x32xf32, #tpu.memory_space<vmem>>, vector<1x32xf32>
    %77 = vector.shape_cast %76 : vector<1x32xf32> to vector<32xf32>
    %78 = vector.shape_cast %77 : vector<32xf32> to vector<1x32xf32>
    %79 = vector.broadcast %78 : vector<1x32xf32> to vector<64x32xf32>
    %80 = arith.addf %75, %79 : vector<64x32xf32>
    %81 = arith.addf %80, %0 : vector<64x32xf32>
    %c0_23 = arith.constant 0 : index
    %c0_24 = arith.constant 0 : index
    %82 = vector.load %arg7[%c0_23, %c0_24] : memref<1x32xf32, #tpu.memory_space<vmem>>, vector<1x32xf32>
    %83 = vector.shape_cast %82 : vector<1x32xf32> to vector<32xf32>
    %c0_25 = arith.constant 0 : index
    %c0_26 = arith.constant 0 : index
    %84 = vector.load %arg8[%c0_25, %c0_26] : memref<1x32xf32, #tpu.memory_space<vmem>>, vector<1x32xf32>
    %85 = vector.shape_cast %84 : vector<1x32xf32> to vector<32xf32>
    %cst_27 = arith.constant dense<0.000000e+00> : vector<64xf32>
    %86 = vector.multi_reduction <add>, %81, %cst_27 [1] : vector<64x32xf32> to vector<64xf32>
    %87 = vector.shape_cast %86 : vector<64xf32> to vector<64x1xf32>
    %cst_28 = arith.constant 3.200000e+01 : f32
    %88 = vector.broadcast %cst_28 : f32 to vector<64x1xf32>
    %89 = arith.divf %87, %88 : vector<64x1xf32>
    %90 = vector.broadcast %89 : vector<64x1xf32> to vector<64x32xf32>
    %91 = arith.subf %81, %90 : vector<64x32xf32>
    %92 = arith.mulf %91, %91 : vector<64x32xf32>
    %cst_29 = arith.constant dense<0.000000e+00> : vector<64xf32>
    %93 = vector.multi_reduction <add>, %92, %cst_29 [1] : vector<64x32xf32> to vector<64xf32>
    %94 = vector.shape_cast %93 : vector<64xf32> to vector<64x1xf32>
    %cst_30 = arith.constant 3.200000e+01 : f32
    %95 = vector.broadcast %cst_30 : f32 to vector<64x1xf32>
    %96 = arith.divf %94, %95 : vector<64x1xf32>
    %97 = vector.broadcast %89 : vector<64x1xf32> to vector<64x32xf32>
    %98 = arith.subf %81, %97 : vector<64x32xf32>
    %cst_31 = arith.constant 9.99999974E-6 : f32
    %99 = vector.broadcast %cst_31 : f32 to vector<64x1xf32>
    %100 = arith.addf %96, %99 : vector<64x1xf32>
    %101 = math.rsqrt %100 : vector<64x1xf32>
    %102 = vector.broadcast %101 : vector<64x1xf32> to vector<64x32xf32>
    %103 = arith.mulf %98, %102 : vector<64x32xf32>
    %104 = vector.shape_cast %83 : vector<32xf32> to vector<1x32xf32>
    %105 = vector.broadcast %104 : vector<1x32xf32> to vector<64x32xf32>
    %106 = arith.mulf %103, %105 : vector<64x32xf32>
    %107 = vector.shape_cast %85 : vector<32xf32> to vector<1x32xf32>
    %108 = vector.broadcast %107 : vector<1x32xf32> to vector<64x32xf32>
    %109 = arith.addf %106, %108 : vector<64x32xf32>
    %c0_32 = arith.constant 0 : index
    %c0_33 = arith.constant 0 : index
    %110 = vector.load %arg9[%c0_32, %c0_33] : memref<32x32xf32, #tpu.memory_space<vmem>>, vector<32x32xf32>
    %cst_34 = arith.constant dense<0.000000e+00> : vector<64x32xf32>
    %111 = tpu.matmul %109, %110, %cst_34 {dimension_numbers = #tpu.dot_dimension_numbers<[1], [0], [0], [1], [0, 0, 1, 1], [], []>} : vector<64x32xf32>, vector<32x32xf32>, vector<64x32xf32> -> vector<64x32xf32>
    %c0_35 = arith.constant 0 : index
    %c0_36 = arith.constant 0 : index
    %112 = vector.load %arg10[%c0_35, %c0_36] : memref<1x32xf32, #tpu.memory_space<vmem>>, vector<1x32xf32>
    %113 = vector.shape_cast %112 : vector<1x32xf32> to vector<32xf32>
    %114 = vector.shape_cast %113 : vector<32xf32> to vector<1x32xf32>
    %115 = vector.broadcast %114 : vector<1x32xf32> to vector<64x32xf32>
    %116 = arith.addf %111, %115 : vector<64x32xf32>
    %cst_37 = arith.constant 5.000000e-01 : f32
    %117 = vector.broadcast %cst_37 : f32 to vector<64x32xf32>
    %118 = arith.mulf %117, %116 : vector<64x32xf32>
    %cst_38 = arith.constant 4.471500e-02 : f32
    %119 = vector.broadcast %cst_38 : f32 to vector<64x32xf32>
    %120 = arith.mulf %119, %116 : vector<64x32xf32>
    %121 = arith.mulf %120, %116 : vector<64x32xf32>
    %122 = arith.mulf %121, %116 : vector<64x32xf32>
    %123 = arith.addf %116, %122 : vector<64x32xf32>
    %cst_39 = arith.constant 0.797884583 : f32
    %124 = vector.broadcast %cst_39 : f32 to vector<64x32xf32>
    %125 = arith.mulf %124, %123 : vector<64x32xf32>
    %126 = math.tanh %125 : vector<64x32xf32>
    %cst_40 = arith.constant 1.000000e+00 : f32
    %127 = vector.broadcast %cst_40 : f32 to vector<64x32xf32>
    %128 = arith.addf %127, %126 : vector<64x32xf32>
    %129 = arith.mulf %118, %128 : vector<64x32xf32>
    %c0_41 = arith.constant 0 : index
    %c0_42 = arith.constant 0 : index
    %130 = vector.load %arg11[%c0_41, %c0_42] : memref<32x32xf32, #tpu.memory_space<vmem>>, vector<32x32xf32>
    %cst_43 = arith.constant dense<0.000000e+00> : vector<64x32xf32>
    %131 = tpu.matmul %129, %130, %cst_43 {dimension_numbers = #tpu.dot_dimension_numbers<[1], [0], [0], [1], [0, 0, 1, 1], [], []>} : vector<64x32xf32>, vector<32x32xf32>, vector<64x32xf32> -> vector<64x32xf32>
    %c0_44 = arith.constant 0 : index
    %c0_45 = arith.constant 0 : index
    %132 = vector.load %arg12[%c0_44, %c0_45] : memref<1x32xf32, #tpu.memory_space<vmem>>, vector<1x32xf32>
    %133 = vector.shape_cast %132 : vector<1x32xf32> to vector<32xf32>
    %134 = vector.shape_cast %133 : vector<32xf32> to vector<1x32xf32>
    %135 = vector.broadcast %134 : vector<1x32xf32> to vector<64x32xf32>
    %136 = arith.addf %131, %135 : vector<64x32xf32>
    %137 = arith.addf %136, %81 : vector<64x32xf32>
    %c0_46 = arith.constant 0 : index
    %c0_47 = arith.constant 0 : index
    %138 = vector.load %arg13[%c0_46, %c0_47] : memref<64x32xf32, #tpu.memory_space<vmem>>, vector<64x32xf32>
    tpu.vector_store %arg13[%c0_46, %c0_47], %137 {strides = array<i32>} : memref<64x32xf32, #tpu.memory_space<vmem>>, vector<64x32xf32>,
    return
  }
  func.func @transform_0(%arg0: i32) -> (i32, i32) {
    %c0_i32 = arith.constant 0 : i32
    %c0_i32_0 = arith.constant 0 : i32
    return %arg0, %c0_i32 : i32, i32
  }
  func.func @transform_1(%arg0: i32) -> (i32, i32) {
    %c0_i32 = arith.constant 0 : i32
    %c0_i32_0 = arith.constant 0 : i32
    %c0_i32_1 = arith.constant 0 : i32
    return %c0_i32, %c0_i32_0 : i32, i32
  }
  func.func @transform_2(%arg0: i32) -> (i32, i32) {
    %c0_i32 = arith.constant 0 : i32
    %c0_i32_0 = arith.constant 0 : i32
    %c0_i32_1 = arith.constant 0 : i32
    return %c0_i32, %c0_i32_0 : i32, i32
  }
  func.func @transform_3(%arg0: i32) -> (i32, i32) {
    %c0_i32 = arith.constant 0 : i32
    %c0_i32_0 = arith.constant 0 : i32
    %c0_i32_1 = arith.constant 0 : i32
    return %c0_i32, %c0_i32_0 : i32, i32
  }
  func.func @transform_4(%arg0: i32) -> (i32, i32) {
    %c0_i32 = arith.constant 0 : i32
    %c0_i32_0 = arith.constant 0 : i32
    %c0_i32_1 = arith.constant 0 : i32
    return %c0_i32, %c0_i32_0 : i32, i32
  }
  func.func @transform_5(%arg0: i32) -> (i32, i32) {
    %c0_i32 = arith.constant 0 : i32
    %c0_i32_0 = arith.constant 0 : i32
    %c0_i32_1 = arith.constant 0 : i32
    return %c0_i32, %c0_i32_0 : i32, i32
  }
  func.func @transform_6(%arg0: i32) -> (i32, i32) {
    %c0_i32 = arith.constant 0 : i32
    %c0_i32_0 = arith.constant 0 : i32
    %c0_i32_1 = arith.constant 0 : i32
    return %c0_i32, %c0_i32_0 : i32, i32
  }
  func.func @transform_7(%arg0: i32) -> (i32, i32) {
    %c0_i32 = arith.constant 0 : i32
    %c0_i32_0 = arith.constant 0 : i32
    %c0_i32_1 = arith.constant 0 : i32
    return %c0_i32, %c0_i32_0 : i32, i32
  }
  func.func @transform_8(%arg0: i32) -> (i32, i32) {
    %c0_i32 = arith.constant 0 : i32
    %c0_i32_0 = arith.constant 0 : i32
    %c0_i32_1 = arith.constant 0 : i32
    return %c0_i32, %c0_i32_0 : i32, i32
  }
  func.func @transform_9(%arg0: i32) -> (i32, i32) {
    %c0_i32 = arith.constant 0 : i32
    %c0_i32_0 = arith.constant 0 : i32
    %c0_i32_1 = arith.constant 0 : i32
    return %c0_i32, %c0_i32_0 : i32, i32
  }
  func.func @transform_10(%arg0: i32) -> (i32, i32) {
    %c0_i32 = arith.constant 0 : i32
    %c0_i32_0 = arith.constant 0 : i32
    %c0_i32_1 = arith.constant 0 : i32
    return %c0_i32, %c0_i32_0 : i32, i32
  }
  func.func @transform_11(%arg0: i32) -> (i32, i32) {
    %c0_i32 = arith.constant 0 : i32
    %c0_i32_0 = arith.constant 0 : i32
    %c0_i32_1 = arith.constant 0 : i32
    return %c0_i32, %c0_i32_0 : i32, i32
  }
  func.func @transform_12(%arg0: i32) -> (i32, i32) {
    %c0_i32 = arith.constant 0 : i32
    %c0_i32_0 = arith.constant 0 : i32
    return %arg0, %c0_i32 : i32, i32
  }
}

</mosaic_0001>

<llo_original>
// kernel: tpu_custom_call.1
$region0: #{tpu_custom_call.1}
  #allocation0 [shape = 'u32[]', space=smem, size = 0x4, offset = 0x4, fixed_abs, tag = 'smem constant byte address 0x4 - core index']
  #allocation1 [shape = 'u32[144,128]{1,0:T(1,128)}', space=vmem, size = 0x12000, scoped, tag = 'internal scratch']
  %s0 = inlined_call_operand.vmem [shape: f32[128,32], index: 0, kind: input, shape index: {}]
  %s1 = inlined_call_operand.vmem [shape: f32[1,32], index: 1, kind: input, shape index: {}]
  %s2 = inlined_call_operand.vmem [shape: f32[1,32], index: 2, kind: input, shape index: {}]
  %s3 = inlined_call_operand.vmem [shape: f32[32,256], index: 3, kind: input, shape index: {}]
  %s4 = inlined_call_operand.vmem [shape: f32[1,256], index: 4, kind: input, shape index: {}]
  %s5 = inlined_call_operand.vmem [shape: f32[1,32], index: 5, kind: input, shape index: {}]
  %s6 = inlined_call_operand.vmem [shape: f32[1,32], index: 6, kind: input, shape index: {}]
  %s7 = inlined_call_operand.vmem [shape: f32[1,32], index: 7, kind: input, shape index: {}]
  %s8 = inlined_call_operand.vmem [shape: f32[32,32], index: 8, kind: input, shape index: {}]
  %s9 = inlined_call_operand.vmem [shape: f32[1,32], index: 9, kind: input, shape index: {}]
  %s10 = inlined_call_operand.vmem [shape: f32[32,32], index: 10, kind: input, shape index: {}]
  %s11 = inlined_call_operand.vmem [shape: f32[1,32], index: 11, kind: input, shape index: {}]
  %s12 = inlined_call_operand.vmem [shape: f32[128,32], index: 12, kind: output, shape index: {}]
  %s13 = sld [smem:[#allocation0]]
  $region81: #{tpu_custom_call.1} parent=0
    _
  %s15 = ssub.s32 1, %s13
  %s16 = scalar_select 0, %s15, %s13
  loop: start=0, step=1, limit=4
  $region2: #{tpu_custom_call.1} parent=0 // loop_pre_header
    _
  $region3: #{tpu_custom_call.1} parent=0 // loop_header
    %s18 = sphi 0, %s22
    %p19 = scmp.ge.s32.totalorder %s18, 4
    %s28 = sphi 0, %s30
    %s31 = sphi 0, %s28
    %s32 = sphi 0, %s31
    %s48 = sphi 0, %s32
    %s52 = sphi 0, %s52
    %s54 = sphi 0, %s52
    %s55 = sphi 0, %s54
    %s69 = sphi 0, %s55
    %s73 = sphi 0, %s73
    %s75 = sphi 0, %s73
    %s76 = sphi 0, %s75
    %s90 = sphi 0, %s76
    %s94 = sphi 0, %s94
    %s96 = sphi 0, %s94
    %s97 = sphi 0, %s96
    %s111 = sphi 0, %s97
    %s115 = sphi 0, %s115
    %s117 = sphi 0, %s115
    %s118 = sphi 0, %s117
    %s132 = sphi 0, %s118
    %s136 = sphi 0, %s136
    %s138 = sphi 0, %s136
    %s139 = sphi 0, %s138
    %s153 = sphi 0, %s139
    %s157 = sphi 0, %s157
    %s159 = sphi 0, %s157
    %s160 = sphi 0, %s159
    %s174 = sphi 0, %s160
    %s178 = sphi 0, %s178
    %s180 = sphi 0, %s178
    %s181 = sphi 0, %s180
    %s195 = sphi 0, %s181
    %s199 = sphi 0, %s199
    %s201 = sphi 0, %s199
    %s202 = sphi 0, %s201
    %s216 = sphi 0, %s202
    %s220 = sphi 0, %s220
    %s222 = sphi 0, %s220
    %s223 = sphi 0, %s222
    %s237 = sphi 0, %s223
    %s241 = sphi 0, %s241
    %s243 = sphi 0, %s241
    %s244 = sphi 0, %s243
    %s258 = sphi 0, %s244
    %s262 = sphi 0, %s262
    %s264 = sphi 0, %s262
    %s265 = sphi 0, %s264
    %s279 = sphi 0, %s265
    %s285 = sphi 0, %s287
    %s288 = sphi 0, %s285
    %s289 = sphi 0, %s288
    %s305 = sphi 0, %s289
  $region4: #{tpu_custom_call.1} parent=0 // loop_header_branch
    %21 = sbr.rel (%p19) target = $region8
  $region5: #{tpu_custom_call.1} parent=0 // loop_body
    %s23 = ssub.s32 %s18, 1
    %s24 = ssub.s32 %s18, 2
    %s25 = sadd.s32 %s18, 1
    %s26 = ssub.s32 %s18, %s25
    %p27 = scmp.eq.s32.totalorder %s26, 0
    %s29 = sadd.s32 %s28, 1
    %s30 = scalar_select %p27, %s28, %s29
    %p33 = pneg %p27
    %p34 = scmp.eq.s32.totalorder %s18, 1
    %p35 = por %p33, %p34
    %p36 = scmp.ne.s32.totalorder %s28, %s31
    %p37 = scmp.eq.s32.totalorder %s18, 0
    %p38 = por %p36, %p37
    %p39 = scmp.ne.s32.totalorder %s28, %s31
    %p40 = scmp.eq.s32.totalorder %s23, 1
    %p41 = por %p39, %p40
    %p42 = scmp.ne.s32.totalorder %s31, %s32
    %p43 = scmp.eq.s32.totalorder %s23, 0
    %p44 = por %p42, %p43
    %p45 = scmp.ne.s32.totalorder %s31, %s32
    %p46 = scmp.eq.s32.totalorder %s24, 1
    %p47 = por %p45, %p46
    %p49 = scmp.ne.s32.totalorder %s32, %s48
    %p50 = scmp.eq.s32.totalorder %s24, 0
    %p51 = por %p49, %p50
    %s53 = sadd.s32 %s52, 1
    %p56 = scmp.eq.s32.totalorder %s18, 1
    %p57 = scmp.ne.s32.totalorder %s52, %s54
    %p58 = scmp.eq.s32.totalorder %s18, 0
    %p59 = por %p57, %p58
    %p60 = scmp.ne.s32.totalorder %s52, %s54
    %p61 = scmp.eq.s32.totalorder %s23, 1
    %p62 = por %p60, %p61
    %p63 = scmp.ne.s32.totalorder %s54, %s55
    %p64 = scmp.eq.s32.totalorder %s23, 0
    %p65 = por %p63, %p64
    %p66 = scmp.ne.s32.totalorder %s54, %s55
    %p67 = scmp.eq.s32.totalorder %s24, 1
    %p68 = por %p66, %p67
    %p70 = scmp.ne.s32.totalorder %s55, %s69
    %p71 = scmp.eq.s32.totalorder %s24, 0
    %p72 = por %p70, %p71
    %s74 = sadd.s32 %s73, 1
    %p77 = scmp.eq.s32.totalorder %s18, 1
    %p78 = scmp.ne.s32.totalorder %s73, %s75
    %p79 = scmp.eq.s32.totalorder %s18, 0
    %p80 = por %p78, %p79
    %p81 = scmp.ne.s32.totalorder %s73, %s75
    %p82 = scmp.eq.s32.totalorder %s23, 1
    %p83 = por %p81, %p82
    %p84 = scmp.ne.s32.totalorder %s75, %s76
    %p85 = scmp.eq.s32.totalorder %s23, 0
    %p86 = por %p84, %p85
    %p87 = scmp.ne.s32.totalorder %s75, %s76
    %p88 = scmp.eq.s32.totalorder %s24, 1
    %p89 = por %p87, %p88
    %p91 = scmp.ne.s32.totalorder %s76, %s90
    %p92 = scmp.eq.s32.totalorder %s24, 0
    %p93 = por %p91, %p92
    %s95 = sadd.s32 %s94, 1
    %p98 = scmp.eq.s32.totalorder %s18, 1
    %p99 = scmp.ne.s32.totalorder %s94, %s96
    %p100 = scmp.eq.s32.totalorder %s18, 0
    %p101 = por %p99, %p100
    %p102 = scmp.ne.s32.totalorder %s94, %s96
    %p103 = scmp.eq.s32.totalorder %s23, 1
    %p104 = por %p102, %p103
    %p105 = scmp.ne.s32.totalorder %s96, %s97
    %p106 = scmp.eq.s32.totalorder %s23, 0
    %p107 = por %p105, %p106
    %p108 = scmp.ne.s32.totalorder %s96, %s97
    %p109 = scmp.eq.s32.totalorder %s24, 1
    %p110 = por %p108, %p109
    %p112 = scmp.ne.s32.totalorder %s97, %s111
    %p113 = scmp.eq.s32.totalorder %s24, 0
    %p114 = por %p112, %p113
    %s116 = sadd.s32 %s115, 1
    %p119 = scmp.eq.s32.totalorder %s18, 1
    %p120 = scmp.ne.s32.totalorder %s115, %s117
    %p121 = scmp.eq.s32.totalorder %s18, 0
    %p122 = por %p120, %p121
    %p123 = scmp.ne.s32.totalorder %s115, %s117
    %p124 = scmp.eq.s32.totalorder %s23, 1
    %p125 = por %p123, %p124
    %p126 = scmp.ne.s32.totalorder %s117, %s118
    %p127 = scmp.eq.s32.totalorder %s23, 0
    %p128 = por %p126, %p127
    %p129 = scmp.ne.s32.totalorder %s117, %s118
    %p130 = scmp.eq.s32.totalorder %s24, 1
    %p131 = por %p129, %p130
    %p133 = scmp.ne.s32.totalorder %s118, %s132
    %p134 = scmp.eq.s32.totalorder %s24, 0
    %p135 = por %p133, %p134
    %s137 = sadd.s32 %s136, 1
    %p140 = scmp.eq.s32.totalorder %s18, 1
    %p141 = scmp.ne.s32.totalorder %s136, %s138
    %p142 = scmp.eq.s32.totalorder %s18, 0
    %p143 = por %p141, %p142
    %p144 = scmp.ne.s32.totalorder %s136, %s138
    %p145 = scmp.eq.s32.totalorder %s23, 1
    %p146 = por %p144, %p145
    %p147 = scmp.ne.s32.totalorder %s138, %s139
    %p148 = scmp.eq.s32.totalorder %s23, 0
    %p149 = por %p147, %p148
    %p150 = scmp.ne.s32.totalorder %s138, %s139
    %p151 = scmp.eq.s32.totalorder %s24, 1
    %p152 = por %p150, %p151
    %p154 = scmp.ne.s32.totalorder %s139, %s153
    %p155 = scmp.eq.s32.totalorder %s24, 0
    %p156 = por %p154, %p155
    %s158 = sadd.s32 %s157, 1
    %p161 = scmp.eq.s32.totalorder %s18, 1
    %p162 = scmp.ne.s32.totalorder %s157, %s159
    %p163 = scmp.eq.s32.totalorder %s18, 0
    %p164 = por %p162, %p163
    %p165 = scmp.ne.s32.totalorder %s157, %s159
    %p166 = scmp.eq.s32.totalorder %s23, 1
    %p167 = por %p165, %p166
    %p168 = scmp.ne.s32.totalorder %s159, %s160
    %p169 = scmp.eq.s32.totalorder %s23, 0
    %p170 = por %p168, %p169
    %p171 = scmp.ne.s32.totalorder %s159, %s160
    %p172 = scmp.eq.s32.totalorder %s24, 1
    %p173 = por %p171, %p172
    %p175 = scmp.ne.s32.totalorder %s160, %s174
    %p176 = scmp.eq.s32.totalorder %s24, 0
    %p177 = por %p175, %p176
    %s179 = sadd.s32 %s178, 1
    %p182 = scmp.eq.s32.totalorder %s18, 1
    %p183 = scmp.ne.s32.totalorder %s178, %s180
    %p184 = scmp.eq.s32.totalorder %s18, 0
    %p185 = por %p183, %p184
    %p186 = scmp.ne.s32.totalorder %s178, %s180
    %p187 = scmp.eq.s32.totalorder %s23, 1
    %p188 = por %p186, %p187
    %p189 = scmp.ne.s32.totalorder %s180, %s181
    %p190 = scmp.eq.s32.totalorder %s23, 0
    %p191 = por %p189, %p190
    %p192 = scmp.ne.s32.totalorder %s180, %s181
    %p193 = scmp.eq.s32.totalorder %s24, 1
    %p194 = por %p192, %p193
    %p196 = scmp.ne.s32.totalorder %s181, %s195
    %p197 = scmp.eq.s32.totalorder %s24, 0
    %p198 = por %p196, %p197
    %s200 = sadd.s32 %s199, 1
    %p203 = scmp.eq.s32.totalorder %s18, 1
    %p204 = scmp.ne.s32.totalorder %s199, %s201
    %p205 = scmp.eq.s32.totalorder %s18, 0
    %p206 = por %p204, %p205
    %p207 = scmp.ne.s32.totalorder %s199, %s201
    %p208 = scmp.eq.s32.totalorder %s23, 1
    %p209 = por %p207, %p208
    %p210 = scmp.ne.s32.totalorder %s201, %s202
    %p211 = scmp.eq.s32.totalorder %s23, 0
    %p212 = por %p210, %p211
    %p213 = scmp.ne.s32.totalorder %s201, %s202
    %p214 = scmp.eq.s32.totalorder %s24, 1
    %p215 = por %p213, %p214
    %p217 = scmp.ne.s32.totalorder %s202, %s216
    %p218 = scmp.eq.s32.totalorder %s24, 0
    %p219 = por %p217, %p218
    %s221 = sadd.s32 %s220, 1
    %p224 = scmp.eq.s32.totalorder %s18, 1
    %p225 = scmp.ne.s32.totalorder %s220, %s222
    %p226 = scmp.eq.s32.totalorder %s18, 0
    %p227 = por %p225, %p226
    %p228 = scmp.ne.s32.totalorder %s220, %s222
    %p229 = scmp.eq.s32.totalorder %s23, 1
    %p230 = por %p228, %p229
    %p231 = scmp.ne.s32.totalorder %s222, %s223
    %p232 = scmp.eq.s32.totalorder %s23, 0
    %p233 = por %p231, %p232
    %p234 = scmp.ne.s32.totalorder %s222, %s223
    %p235 = scmp.eq.s32.totalorder %s24, 1
    %p236 = por %p234, %p235
    %p238 = scmp.ne.s32.totalorder %s223, %s237
    %p239 = scmp.eq.s32.totalorder %s24, 0
    %p240 = por %p238, %p239
    %s242 = sadd.s32 %s241, 1
    %p245 = scmp.eq.s32.totalorder %s18, 1
    %p246 = scmp.ne.s32.totalorder %s241, %s243
    %p247 = scmp.eq.s32.totalorder %s18, 0
    %p248 = por %p246, %p247
    %p249 = scmp.ne.s32.totalorder %s241, %s243
    %p250 = scmp.eq.s32.totalorder %s23, 1
    %p251 = por %p249, %p250
    %p252 = scmp.ne.s32.totalorder %s243, %s244
    %p253 = scmp.eq.s32.totalorder %s23, 0
    %p254 = por %p252, %p253
    %p255 = scmp.ne.s32.totalorder %s243, %s244
    %p256 = scmp.eq.s32.totalorder %s24, 1
    %p257 = por %p255, %p256
    %p259 = scmp.ne.s32.totalorder %s244, %s258
    %p260 = scmp.eq.s32.totalorder %s24, 0
    %p261 = por %p259, %p260
    %s263 = sadd.s32 %s262, 1
    %p266 = scmp.eq.s32.totalorder %s18, 1
    %p267 = scmp.ne.s32.totalorder %s262, %s264
    %p268 = scmp.eq.s32.totalorder %s18, 0
    %p269 = por %p267, %p268
    %p270 = scmp.ne.s32.totalorder %s262, %s264
    %p271 = scmp.eq.s32.totalorder %s23, 1
    %p272 = por %p270, %p271
    %p273 = scmp.ne.s32.totalorder %s264, %s265
    %p274 = scmp.eq.s32.totalorder %s23, 0
    %p275 = por %p273, %p274
    %p276 = scmp.ne.s32.totalorder %s264, %s265
    %p277 = scmp.eq.s32.totalorder %s24, 1
    %p278 = por %p276, %p277
    %p280 = scmp.ne.s32.totalorder %s265, %s279
    %p281 = scmp.eq.s32.totalorder %s24, 0
    %p282 = por %p280, %p281
    %s283 = ssub.s32 %s18, %s25
    %p284 = scmp.eq.s32.totalorder %s283, 0
    %s286 = sadd.s32 %s285, 1
    %s287 = scalar_select %p284, %s285, %s286
    %p290 = pneg %p284
    %p291 = scmp.eq.s32.totalorder %s18, 1
    %p292 = por %p290, %p291
    %p293 = scmp.ne.s32.totalorder %s285, %s288
    %p294 = scmp.eq.s32.totalorder %s18, 0
    %p295 = por %p293, %p294
    %p296 = scmp.ne.s32.totalorder %s285, %s288
    %p297 = scmp.eq.s32.totalorder %s23, 1
    %p298 = por %p296, %p297
    %p299 = scmp.ne.s32.totalorder %s288, %s289
    %p300 = scmp.eq.s32.totalorder %s23, 0
    %p301 = por %p299, %p300
    %p302 = scmp.ne.s32.totalorder %s288, %s289
    %p303 = scmp.eq.s32.totalorder %s24, 1
    %p304 = por %p302, %p303
    %p306 = scmp.ne.s32.totalorder %s289, %s305
    %p307 = scmp.eq.s32.totalorder %s24, 0
    %p308 = por %p306, %p307
    %p309 = scmp.le.s32.totalorder 1, %s18
    %p310 = scmp.lt.s32.totalorder %s18, 3
    %p311 = pnand %p309, %p310
    %p312 = pneg %p311
    // Predicated region
    $region9: #{tpu_custom_call.1} parent=5 // pred_check
      _
    $region10: #{tpu_custom_call.1} parent=5 // pred_check_branch
      %314 = sbr.rel (%p311) target = $region12
    $region11: #{tpu_custom_call.1} parent=5 // pred_region
      %s315 = ssub.s32 %s18, 1
      // Predicated region
      $region13: #{tpu_custom_call.1} parent=11 // pred_check
        %p316 = pneg %p65
      $region14: #{tpu_custom_call.1} parent=11 // pred_check_branch
        %318 = sbr.rel (%p316) target = $region16
      $region15: #{tpu_custom_call.1} parent=11 // pred_region
        _
      $region16: #{tpu_custom_call.1} parent=11 // pred_fallthru
        _
      // Predicated region
      $region17: #{tpu_custom_call.1} parent=11 // pred_check
        %p319 = pneg %p86
      $region18: #{tpu_custom_call.1} parent=11 // pred_check_branch
        %321 = sbr.rel (%p319) target = $region20
      $region19: #{tpu_custom_call.1} parent=11 // pred_region
        _
      $region20: #{tpu_custom_call.1} parent=11 // pred_fallthru
        _
      // Predicated region
      $region21: #{tpu_custom_call.1} parent=11 // pred_check
        %p322 = pneg %p107
      $region22: #{tpu_custom_call.1} parent=11 // pred_check_branch
        %324 = sbr.rel (%p322) target = $region24
      $region23: #{tpu_custom_call.1} parent=11 // pred_region
        _
      $region24: #{tpu_custom_call.1} parent=11 // pred_fallthru
        _
      // Predicated region
      $region25: #{tpu_custom_call.1} parent=11 // pred_check
        %p325 = pneg %p128
      $region26: #{tpu_custom_call.1} parent=11 // pred_check_branch
        %327 = sbr.rel (%p325) target = $region28
      $region27: #{tpu_custom_call.1} parent=11 // pred_region
        _
      $region28: #{tpu_custom_call.1} parent=11 // pred_fallthru
        _
      // Predicated region
      $region29: #{tpu_custom_call.1} parent=11 // pred_check
        %p328 = pneg %p149
      $region30: #{tpu_custom_call.1} parent=11 // pred_check_branch
        %330 = sbr.rel (%p328) target = $region32
      $region31: #{tpu_custom_call.1} parent=11 // pred_region
        _
      $region32: #{tpu_custom_call.1} parent=11 // pred_fallthru
        _
      // Predicated region
      $region33: #{tpu_custom_call.1} parent=11 // pred_check
        %p331 = pneg %p170
      $region34: #{tpu_custom_call.1} parent=11 // pred_check_branch
        %333 = sbr.rel (%p331) target = $region36
      $region35: #{tpu_custom_call.1} parent=11 // pred_region
        _
      $region36: #{tpu_custom_call.1} parent=11 // pred_fallthru
        _
      // Predicated region
      $region37: #{tpu_custom_call.1} parent=11 // pred_check
        %p334 = pneg %p191
      $region38: #{tpu_custom_call.1} parent=11 // pred_check_branch
        %336 = sbr.rel (%p334) target = $region40
      $region39: #{tpu_custom_call.1} parent=11 // pred_region
        _
      $region40: #{tpu_custom_call.1} parent=11 // pred_fallthru
        _
      // Predicated region
      $region41: #{tpu_custom_call.1} parent=11 // pred_check
        %p337 = pneg %p212
      $region42: #{tpu_custom_call.1} parent=11 // pred_check_branch
        %339 = sbr.rel (%p337) target = $region44
      $region43: #{tpu_custom_call.1} parent=11 // pred_region
        _
      $region44: #{tpu_custom_call.1} parent=11 // pred_fallthru
        _
      // Predicated region
      $region45: #{tpu_custom_call.1} parent=11 // pred_check
        %p340 = pneg %p233
      $region46: #{tpu_custom_call.1} parent=11 // pred_check_branch
        %342 = sbr.rel (%p340) target = $region48
      $region47: #{tpu_custom_call.1} parent=11 // pred_region
        _
      $region48: #{tpu_custom_call.1} parent=11 // pred_fallthru
        _
      // Predicated region
      $region49: #{tpu_custom_call.1} parent=11 // pred_check
        %p343 = pneg %p254
      $region50: #{tpu_custom_call.1} parent=11 // pred_check_branch
        %345 = sbr.rel (%p343) target = $region52
      $region51: #{tpu_custom_call.1} parent=11 // pred_region
        _
      $region52: #{tpu_custom_call.1} parent=11 // pred_fallthru
        _
      // Predicated region
      $region53: #{tpu_custom_call.1} parent=11 // pred_check
        %p346 = pneg %p275
      $region54: #{tpu_custom_call.1} parent=11 // pred_check_branch
        %348 = sbr.rel (%p346) target = $region56
      $region55: #{tpu_custom_call.1} parent=11 // pred_region
        _
      $region56: #{tpu_custom_call.1} parent=11 // pred_fallthru
        _
    $region12: #{tpu_custom_call.1} parent=5 // pred_fallthru
      _
    %p349 = scmp.lt.s32.totalorder %s18, 2
    // Predicated region
    $region57: #{tpu_custom_call.1} parent=5 // pred_check
      %p350 = pneg %p349
    $region58: #{tpu_custom_call.1} parent=5 // pred_check_branch
      %352 = sbr.rel (%p350) target = $region60
    $region59: #{tpu_custom_call.1} parent=5 // pred_region
      // Predicated region
      $region61: #{tpu_custom_call.1} parent=59 // pred_check
        %p353 = pneg %p38
      $region62: #{tpu_custom_call.1} parent=59 // pred_check_branch
        %355 = sbr.rel (%p353) target = $region64
      $region63: #{tpu_custom_call.1} parent=59 // pred_region
        %s356 = smul.u32 8, %s18
        %p357 = scmp.lt.s32.totalorder %s356, 15
        %s358 = scalar_select %p357, %s356, 15
        %s359 = smul.addr %s358, 8
        %s360 = scalar_lea.vmem %s0, %s359
        %s361 = smul.u32 8, %s18
      $region64: #{tpu_custom_call.1} parent=59 // pred_fallthru
        _
    $region60: #{tpu_custom_call.1} parent=5 // pred_fallthru
      _
    %p362 = scmp.le.s32.totalorder 1, %s18
    %p363 = scmp.lt.s32.totalorder %s18, 3
    %p364 = pnand %p362, %p363
    %p365 = pneg %p364
    // Predicated region
    $region65: #{tpu_custom_call.1} parent=5 // pred_check
      _
    $region66: #{tpu_custom_call.1} parent=5 // pred_check_branch
      %367 = sbr.rel (%p364) target = $region68
    $region67: #{tpu_custom_call.1} parent=5 // pred_region
      %s368 = ssub.s32 %s18, 1
      %s369 = smul.u32 8, %s23
      %p370 = scmp.lt.s32.totalorder %s369, 15
      %s371 = scalar_select %p370, %s369, 15
      %s372 = smul.addr %s371, 8
      %s373 = scalar_lea.vmem %s0, %s372
      %p374 = pneg %p44
      %p375 = pneg %p41
      %p376 = pneg %p65
      %p377 = pneg %p62
      %p378 = pneg %p86
      %p379 = pneg %p83
      %p380 = pneg %p107
      %p381 = pneg %p104
      %p382 = pneg %p128
      %p383 = pneg %p125
      %p384 = pneg %p149
      %p385 = pneg %p146
      %p386 = pneg %p170
      %p387 = pneg %p167
      %p388 = pneg %p191
      %p389 = pneg %p188
      %p390 = pneg %p212
      %p391 = pneg %p209
      %p392 = pneg %p233
      %p393 = pneg %p230
      %p394 = pneg %p254
      %p395 = pneg %p251
      %p396 = pneg %p275
      %p397 = pneg %p272
      %p398 = pneg %p301
      %p399 = pneg %p298
      %s400 = smul.u32 8, %s23
      %p401 = scmp.lt.s32.totalorder %s400, 15
      %s402 = scalar_select %p401, %s400, 15
      %s403 = smul.addr %s402, 8
      %s404 = scalar_lea.vmem %s12, %s403
      %s405 = smul.u32 8, %s23
      %p406 = scmp.lt.s32.totalorder %s405, 15
      %s407 = scalar_select %p406, %s405, 15
      %s408 = smul.addr %s407, 8
      %s409 = scalar_lea.vmem %s0, %s408
      %s410 = smul.u32 8, %s23
      %s411 = smul.u32 8, %s23
      %p412 = scmp.lt.s32.totalorder %s411, 15
      %s413 = scalar_select %p412, %s411, 15
      %s414 = smul.addr %s413, 8
      %s415 = scalar_lea.vmem %s12, %s414
      %s416 = smul.u32 8, %s23
      %v417 = vld [vmem:[%s409] sm:$0xff]
      %v418 = vld [vmem:[%s409 + $0x8] sm:$0xff]
      %v419 = vld [vmem:[%s409 + $0x10] sm:$0xff]
      %v420 = vld [vmem:[%s409 + $0x18] sm:$0xff]
      %v421 = vld [vmem:[%s409 + $0x20] sm:$0xff]
      %v422 = vld [vmem:[%s409 + $0x28] sm:$0xff]
      %v423 = vld [vmem:[%s409 + $0x30] sm:$0xff]
      %v424 = vld [vmem:[%s409 + $0x38] sm:$0xff]
      %v425 = vld [vmem:[%s1] sm:$0x1]
      %v426 = vld [vmem:[%s2] sm:$0x1]
      %vm427 = vcmask 261120
      %v428 = vsel %vm427, %v417, 0.0
      %429 = vadd.xlane.f32.xlu0 %v428
      %v430 = vpop.xlane.xlu0 %429
      %v431 = vsel %vm427, %v418, 0.0
      %432 = vadd.xlane.f32.xlu0 %v431
      %v433 = vpop.xlane.xlu0 %432
      %v434 = vsel %vm427, %v419, 0.0
      %435 = vadd.xlane.f32.xlu0 %v434
      %v436 = vpop.xlane.xlu0 %435
      %v437 = vsel %vm427, %v420, 0.0
      %438 = vadd.xlane.f32.xlu0 %v437
      %v439 = vpop.xlane.xlu0 %438
      %v440 = vsel %vm427, %v421, 0.0
      %441 = vadd.xlane.f32.xlu0 %v440
      %v442 = vpop.xlane.xlu0 %441
      %v443 = vsel %vm427, %v422, 0.0
      %444 = vadd.xlane.f32.xlu0 %v443
      %v445 = vpop.xlane.xlu0 %444
      %v446 = vsel %vm427, %v423, 0.0
      %447 = vadd.xlane.f32.xlu0 %v446
      %v448 = vpop.xlane.xlu0 %447
      %v449 = vsel %vm427, %v424, 0.0
      %450 = vadd.xlane.f32.xlu0 %v449
      %v451 = vpop.xlane.xlu0 %450
      %v452 = vrcp.pop 32.0
      %v453 = vmul.f32 %v430, %v452
      %v454 = vmul.f32 %v433, %v452
      %v455 = vmul.f32 %v436, %v452
      %v456 = vmul.f32 %v439, %v452
      %v457 = vmul.f32 %v442, %v452
      %v458 = vmul.f32 %v445, %v452
      %v459 = vmul.f32 %v448, %v452
      %v460 = vmul.f32 %v451, %v452
      %v461 = vsub.f32 %v417, %v453
      %v462 = vsub.f32 %v418, %v454
      %v463 = vsub.f32 %v419, %v455
      %v464 = vsub.f32 %v420, %v456
      %v465 = vsub.f32 %v421, %v457
      %v466 = vsub.f32 %v422, %v458
      %v467 = vsub.f32 %v423, %v459
      %v468 = vsub.f32 %v424, %v460
      %v469 = vmul.f32 %v461, %v461
      %v470 = vmul.f32 %v462, %v462
      %v471 = vmul.f32 %v463, %v463
      %v472 = vmul.f32 %v464, %v464
      %v473 = vmul.f32 %v465, %v465
      %v474 = vmul.f32 %v466, %v466
      %v475 = vmul.f32 %v467, %v467
      %v476 = vmul.f32 %v468, %v468
      %v477 = vsel %vm427, %v469, 0.0
      %478 = vadd.xlane.f32.xlu0 %v477
      %v479 = vpop.xlane.xlu0 %478
      %v480 = vsel %vm427, %v470, 0.0
      %481 = vadd.xlane.f32.xlu0 %v480
      %v482 = vpop.xlane.xlu0 %481
      %v483 = vsel %vm427, %v471, 0.0
      %484 = vadd.xlane.f32.xlu0 %v483
      %v485 = vpop.xlane.xlu0 %484
      %v486 = vsel %vm427, %v472, 0.0
      %487 = vadd.xlane.f32.xlu0 %v486
      %v488 = vpop.xlane.xlu0 %487
      %v489 = vsel %vm427, %v473, 0.0
      %490 = vadd.xlane.f32.xlu0 %v489
      %v491 = vpop.xlane.xlu0 %490
      %v492 = vsel %vm427, %v474, 0.0
      %493 = vadd.xlane.f32.xlu0 %v492
      %v494 = vpop.xlane.xlu0 %493
      %v495 = vsel %vm427, %v475, 0.0
      %496 = vadd.xlane.f32.xlu0 %v495
      %v497 = vpop.xlane.xlu0 %496
      %v498 = vsel %vm427, %v476, 0.0
      %499 = vadd.xlane.f32.xlu0 %v498
      %v500 = vpop.xlane.xlu0 %499
      %v501 = vmul.f32 %v479, %v452
      %v502 = vmul.f32 %v482, %v452
      %v503 = vmul.f32 %v485, %v452
      %v504 = vmul.f32 %v488, %v452
      %v505 = vmul.f32 %v491, %v452
      %v506 = vmul.f32 %v494, %v452
      %v507 = vmul.f32 %v497, %v452
      %v508 = vmul.f32 %v500, %v452
      %v509 = vadd.f32 %v501, 1e-05
      %v510 = vadd.f32 %v502, 1e-05
      %v511 = vadd.f32 %v503, 1e-05
      %v512 = vadd.f32 %v504, 1e-05
      %v513 = vadd.f32 %v505, 1e-05
      %v514 = vadd.f32 %v506, 1e-05
      %v515 = vadd.f32 %v507, 1e-05
      %v516 = vadd.f32 %v508, 1e-05
      %v517 = vrsqrt.pop %v509
      %v518 = vrsqrt.pop %v510
      %v519 = vrsqrt.pop %v511
      %v520 = vrsqrt.pop %v512
      %v521 = vrsqrt.pop %v513
      %v522 = vrsqrt.pop %v514
      %v523 = vrsqrt.pop %v515
      %v524 = vrsqrt.pop %v516
      %v525 = vmul.f32 %v461, %v517
      %v526 = vmul.f32 %v462, %v518
      %v527 = vmul.f32 %v463, %v519
      %v528 = vmul.f32 %v464, %v520
      %v529 = vmul.f32 %v465, %v521
      %v530 = vmul.f32 %v466, %v522
      %v531 = vmul.f32 %v467, %v523
      %v532 = vmul.f32 %v468, %v524
      %v534 = vlaneseq
      %v535 = vshrl.u32 %v534, 7
      %v536 = vsub.s32 0, %v535
      %v537 = vrot.slane %v425, %v536
      %v539 = vmul.f32 %v525, %v537
      %v540 = vmul.f32 %v526, %v537
      %v541 = vmul.f32 %v527, %v537
      %v542 = vmul.f32 %v528, %v537
      %v543 = vmul.f32 %v529, %v537
      %v544 = vmul.f32 %v530, %v537
      %v545 = vmul.f32 %v531, %v537
      %v546 = vmul.f32 %v532, %v537
      %v548 = vlaneseq
      %v549 = vshrl.u32 %v548, 7
      %v550 = vsub.s32 0, %v549
      %v551 = vrot.slane %v426, %v550
      %v553 = vadd.f32 %v539, %v551
      %v554 = vadd.f32 %v540, %v551
      %v555 = vadd.f32 %v541, %v551
      %v556 = vadd.f32 %v542, %v551
      %v557 = vadd.f32 %v543, %v551
      %v558 = vadd.f32 %v544, %v551
      %v559 = vadd.f32 %v545, %v551
      %v560 = vadd.f32 %v546, %v551
      %v561 = vld [vmem:[%s3] sm:$0xff]
      %v562 = vld [vmem:[%s3 + $0x8] sm:$0xff]
      %v563 = vld [vmem:[%s3 + $0x10] sm:$0xff]
      %v564 = vld [vmem:[%s3 + $0x18] sm:$0xff]
      %v565 = vld [vmem:[%s3 + $0x20] sm:$0xff]
      %v566 = vld [vmem:[%s3 + $0x28] sm:$0xff]
      %v567 = vld [vmem:[%s3 + $0x30] sm:$0xff]
      %v568 = vld [vmem:[%s3 + $0x38] sm:$0xff]
      %v569 = vld [vmem:[%s4] sm:$0x3]
      %v571 = vlaneseq
      %v572 = vshrl.u32 %v571, 7
      %v573 = vsub.s32 0, %v572
      %v574 = vrot.slane %v569, %v573
      %v575 = vlaneseq
      %v576 = vshrl.u32 %v575, 7
      %v577 = vsub.s32 1, %v576
      %v578 = vrot.slane %v569, %v577
      %v582 = vsel %vm427, %v553, 0
      %v585 = vsel %vm427, %v554, 0
      %v588 = vsel %vm427, %v555, 0
      %v591 = vsel %vm427, %v556, 0
      %v594 = vsel %vm427, %v557, 0
      %v597 = vsel %vm427, %v558, 0
      %v600 = vsel %vm427, %v559, 0
      %v603 = vsel %vm427, %v560, 0
      %605 = vmatprep.subr.mxu0 %v562
      %606 = vmatpush1.msra.mxu0 %v561
      %607 = vmatprep.subr.mxu0 %v564
      %608 = vmatpush1.msra.mxu0 %v563
      %609 = vmatprep.subr.mxu0 %v566
      %610 = vmatpush1.msra.mxu0 %v565
      %611 = vmatprep.subr.mxu0 %v568
      %612 = vmatpush1.msra.mxu0 %v567
      %613 = vmatprep.subr.mxu0 0.0
      %614 = vmatpush1.msra.mxu0 0.0
      %615 = vmatprep.subr.mxu0 0.0
      %616 = vmatpush1.msra.mxu0 0.0
      %617 = vmatprep.subr.mxu0 0.0
      %618 = vmatpush1.msra.mxu0 0.0
      %619 = vmatprep.subr.mxu0 0.0
      %620 = vmatpush1.msra.mxu0 0.0
      %621 = vmatprep.subr.mxu0 0.0
      %622 = vmatpush1.msra.mxu0 0.0
      %623 = vmatprep.subr.mxu0 0.0
      %624 = vmatpush1.msra.mxu0 0.0
      %625 = vmatprep.subr.mxu0 0.0
      %626 = vmatpush1.msra.mxu0 0.0
      %627 = vmatprep.subr.mxu0 0.0
      %628 = vmatpush1.msra.mxu0 0.0
      %629 = vmatprep.subr.mxu0 0.0
      %630 = vmatpush1.msra.mxu0 0.0
      %631 = vmatprep.subr.mxu0 0.0
      %632 = vmatpush1.msra.mxu0 0.0
      %633 = vmatprep.subr.mxu0 0.0
      %634 = vmatpush1.msra.mxu0 0.0
      %635 = vmatprep.subr.mxu0 0.0
      %636 = vmatpush1.msra.mxu0 0.0
      %637 = vmatprep.subr.mxu0 0.0
      %638 = vmatpush1.msra.mxu0 0.0
      %639 = vmatprep.subr.mxu0 0.0
      %640 = vmatpush1.msra.mxu0 0.0
      %641 = vmatprep.subr.mxu0 0.0
      %642 = vmatpush1.msra.mxu0 0.0
      %643 = vmatprep.subr.mxu0 0.0
      %644 = vmatpush1.msra.mxu0 0.0
      %645 = vmatprep.subr.mxu0 0.0
      %646 = vmatpush1.msra.mxu0 0.0
      %647 = vmatprep.subr.mxu0 0.0
      %648 = vmatpush1.msra.mxu0 0.0
      %649 = vmatprep.subr.mxu0 0.0
      %650 = vmatpush1.msra.mxu0 0.0
      %651 = vmatprep.subr.mxu0 0.0
      %652 = vmatpush1.msra.mxu0 0.0
      %653 = vmatprep.subr.mxu0 0.0
      %654 = vmatpush1.msra.mxu0 0.0
      %655 = vmatprep.subr.mxu0 0.0
      %656 = vmatpush1.msra.mxu0 0.0
      %657 = vmatprep.subr.mxu0 0.0
      %658 = vmatpush1.msra.mxu0 0.0
      %659 = vmatprep.subr.mxu0 0.0
      %660 = vmatpush1.msra.mxu0 0.0
      %661 = vmatprep.subr.mxu0 0.0
      %662 = vmatpush1.msra.mxu0 0.0
      %663 = vmatprep.subr.mxu0 0.0
      %664 = vmatpush1.msra.mxu0 0.0
      %665 = vmatprep.subr.mxu0 0.0
      %666 = vmatpush1.msra.mxu0 0.0
      %667 = vmatprep.subr.mxu0 0.0
      %668 = vmatpush1.msra.mxu0 0.0
      %669 = vmatprep.mubr.f32.mxu0 0.0
      %670 = vmatmul.mubr.f32.gmra.mrb[0].mxu0 %v582
      %v671 = vpop.f32.mrb[0].mxu0
      %v672 = vadd.f32 %v574, %v671
      %v673 = vpop.f32.mrb[0].mxu0
      %v674 = vadd.f32 %v578, %v673
      %675 = vmatprep.mubr.f32.mxu0 0.0
      %676 = vmatmul.mubr.f32.gmra.mrb[0].mxu0 %v585
      %v677 = vpop.f32.mrb[0].mxu0
      %v678 = vadd.f32 %v574, %v677
      %v679 = vpop.f32.mrb[0].mxu0
      %v680 = vadd.f32 %v578, %v679
      %681 = vmatprep.mubr.f32.mxu0 0.0
      %682 = vmatmul.mubr.f32.gmra.mrb[0].mxu0 %v588
      %v683 = vpop.f32.mrb[0].mxu0
      %v684 = vadd.f32 %v574, %v683
      %v685 = vpop.f32.mrb[0].mxu0
      %v686 = vadd.f32 %v578, %v685
      %687 = vmatprep.mubr.f32.mxu0 0.0
      %688 = vmatmul.mubr.f32.gmra.mrb[0].mxu0 %v591
      %v689 = vpop.f32.mrb[0].mxu0
      %v690 = vadd.f32 %v574, %v689
      %v691 = vpop.f32.mrb[0].mxu0
      %v692 = vadd.f32 %v578, %v691
      %693 = vmatprep.mubr.f32.mxu0 0.0
      %694 = vmatmul.mubr.f32.gmra.mrb[0].mxu0 %v594
      %v695 = vpop.f32.mrb[0].mxu0
      %v696 = vadd.f32 %v574, %v695
      %v697 = vpop.f32.mrb[0].mxu0
      %v698 = vadd.f32 %v578, %v697
      %699 = vmatprep.mubr.f32.mxu0 0.0
      %700 = vmatmul.mubr.f32.gmra.mrb[0].mxu0 %v597
      %v701 = vpop.f32.mrb[0].mxu0
      %v702 = vadd.f32 %v574, %v701
      %v703 = vpop.f32.mrb[0].mxu0
      %v704 = vadd.f32 %v578, %v703
      %705 = vmatprep.mubr.f32.mxu0 0.0
      %706 = vmatmul.mubr.f32.gmra.mrb[0].mxu0 %v600
      %v707 = vpop.f32.mrb[0].mxu0
      %v708 = vadd.f32 %v574, %v707
      %v709 = vpop.f32.mrb[0].mxu0
      %v710 = vadd.f32 %v578, %v709
      %711 = vmatprep.mubr.f32.mxu0 0.0
      %712 = vmatmul.mubr.f32.gmra.mrb[0].mxu0 %v603
      %v713 = vpop.f32.mrb[0].mxu0
      %v714 = vadd.f32 %v574, %v713
      %v715 = vpop.f32.mrb[0].mxu0
      %v716 = vadd.f32 %v578, %v715
      %717 = vdwg.mxu0
      %v719 = vsel %vm427, %v672, 0
      %v722 = vsel %vm427, %v678, 0
      %v725 = vsel %vm427, %v684, 0
      %v728 = vsel %vm427, %v690, 0
      %v731 = vsel %vm427, %v696, 0
      %v734 = vsel %vm427, %v702, 0
      %v737 = vsel %vm427, %v708, 0
      %v740 = vsel %vm427, %v714, 0
      %742 = vmatprep.subr.mxu0 0.0
      %743 = vmatpush1.xpose.msra.mxu0 %v582
      %744 = vmatprep.subr.mxu0 0.0
      %745 = vmatpush1.xpose.msra.mxu0 %v585
      %746 = vmatprep.subr.mxu0 0.0
      %747 = vmatpush1.xpose.msra.mxu0 %v588
      %748 = vmatprep.subr.mxu0 0.0
      %749 = vmatpush1.xpose.msra.mxu0 %v591
      %750 = vmatprep.subr.mxu0 0.0
      %751 = vmatpush1.xpose.msra.mxu0 %v594
      %752 = vmatprep.subr.mxu0 0.0
      %753 = vmatpush1.xpose.msra.mxu0 %v597
      %754 = vmatprep.subr.mxu0 0.0
      %755 = vmatpush1.xpose.msra.mxu0 %v600
      %756 = vmatprep.subr.mxu0 0.0
      %757 = vmatpush1.xpose.msra.mxu0 %v603
      %758 = vmatprep.subr.mxu0 0.0
      %759 = vmatpush1.xpose.msra.mxu0 0.0
      %760 = vmatprep.subr.mxu0 0.0
      %761 = vmatpush1.xpose.msra.mxu0 0.0
      %762 = vmatprep.subr.mxu0 0.0
      %763 = vmatpush1.xpose.msra.mxu0 0.0
      %764 = vmatprep.subr.mxu0 0.0
      %765 = vmatpush1.xpose.msra.mxu0 0.0
      %766 = vmatprep.subr.mxu0 0.0
      %767 = vmatpush1.xpose.msra.mxu0 0.0
      %768 = vmatprep.subr.mxu0 0.0
      %769 = vmatpush1.xpose.msra.mxu0 0.0
      %770 = vmatprep.subr.mxu0 0.0
      %771 = vmatpush1.xpose.msra.mxu0 0.0
      %772 = vmatprep.subr.mxu0 0.0
      %773 = vmatpush1.xpose.msra.mxu0 0.0
      %774 = vmatprep.subr.mxu0 0.0
      %775 = vmatpush1.xpose.msra.mxu0 0.0
      %776 = vmatprep.subr.mxu0 0.0
      %777 = vmatpush1.xpose.msra.mxu0 0.0
      %778 = vmatprep.subr.mxu0 0.0
      %779 = vmatpush1.xpose.msra.mxu0 0.0
      %780 = vmatprep.subr.mxu0 0.0
      %781 = vmatpush1.xpose.msra.mxu0 0.0
      %782 = vmatprep.subr.mxu0 0.0
      %783 = vmatpush1.xpose.msra.mxu0 0.0
      %784 = vmatprep.subr.mxu0 0.0
      %785 = vmatpush1.xpose.msra.mxu0 0.0
      %786 = vmatprep.subr.mxu0 0.0
      %787 = vmatpush1.xpose.msra.mxu0 0.0
      %788 = vmatprep.subr.mxu0 0.0
      %789 = vmatpush1.xpose.msra.mxu0 0.0
      %790 = vmatprep.subr.mxu0 0.0
      %791 = vmatpush1.xpose.msra.mxu0 0.0
      %792 = vmatprep.subr.mxu0 0.0
      %793 = vmatpush1.xpose.msra.mxu0 0.0
      %794 = vmatprep.subr.mxu0 0.0
      %795 = vmatpush1.xpose.msra.mxu0 0.0
      %796 = vmatprep.subr.mxu0 0.0
      %797 = vmatpush1.xpose.msra.mxu0 0.0
      %798 = vmatprep.subr.mxu0 0.0
      %799 = vmatpush1.xpose.msra.mxu0 0.0
      %800 = vmatprep.subr.mxu0 0.0
      %801 = vmatpush1.xpose.msra.mxu0 0.0
      %802 = vmatprep.subr.mxu0 0.0
      %803 = vmatpush1.xpose.msra.mxu0 0.0
      %804 = vmatprep.subr.mxu0 0.0
      %805 = vmatpush1.xpose.msra.mxu0 0.0
      %806 = vmatprep.mubr.f32.mxu0 0.0
      %807 = vmatmul.mubr.f32.gmra.mrb[0].mxu0 %v719
      %v808 = vpop.f32.mrb[0].mxu0
      %v809 = vadd.f32 0.0, %v808
      %v810 = vpop.f32.mrb[0].mxu0
      %811 = vmatprep.mubr.f32.mxu0 0.0
      %812 = vmatmul.mubr.f32.gmra.mrb[0].mxu0 %v722
      %v813 = vpop.f32.mrb[0].mxu0
      %v814 = vadd.f32 0.0, %v813
      %v815 = vpop.f32.mrb[0].mxu0
      %816 = vmatprep.mubr.f32.mxu0 0.0
      %817 = vmatmul.mubr.f32.gmra.mrb[0].mxu0 %v725
      %v818 = vpop.f32.mrb[0].mxu0
      %v819 = vadd.f32 0.0, %v818
      %v820 = vpop.f32.mrb[0].mxu0
      %821 = vmatprep.mubr.f32.mxu0 0.0
      %822 = vmatmul.mubr.f32.gmra.mrb[0].mxu0 %v728
      %v823 = vpop.f32.mrb[0].mxu0
      %v824 = vadd.f32 0.0, %v823
      %v825 = vpop.f32.mrb[0].mxu0
      %826 = vmatprep.mubr.f32.mxu0 0.0
      %827 = vmatmul.mubr.f32.gmra.mrb[0].mxu0 %v731
      %v828 = vpop.f32.mrb[0].mxu0
      %v829 = vadd.f32 0.0, %v828
      %v830 = vpop.f32.mrb[0].mxu0
      %831 = vmatprep.mubr.f32.mxu0 0.0
      %832 = vmatmul.mubr.f32.gmra.mrb[0].mxu0 %v734
      %v833 = vpop.f32.mrb[0].mxu0
      %v834 = vadd.f32 0.0, %v833
      %v835 = vpop.f32.mrb[0].mxu0
      %836 = vmatprep.mubr.f32.mxu0 0.0
      %837 = vmatmul.mubr.f32.gmra.mrb[0].mxu0 %v737
      %v838 = vpop.f32.mrb[0].mxu0
      %v839 = vadd.f32 0.0, %v838
      %v840 = vpop.f32.mrb[0].mxu0
      %841 = vmatprep.mubr.f32.mxu0 0.0
      %842 = vmatmul.mubr.f32.gmra.mrb[0].mxu0 %v740
      %v843 = vpop.f32.mrb[0].mxu0
      %v844 = vadd.f32 0.0, %v843
      %v845 = vpop.f32.mrb[0].mxu0
      %846 = vdwg.mxu0
      %847 = vrot.lane.b32.xlu0 %v672, 96
      %v848 = vpop.permute.xlu0 %847
      %849 = vrot.lane.b32.xlu0 %v678, 96
      %v850 = vpop.permute.xlu0 %849
      %851 = vrot.lane.b32.xlu0 %v684, 96
      %v852 = vpop.permute.xlu0 %851
      %853 = vrot.lane.b32.xlu0 %v690, 96
      %v854 = vpop.permute.xlu0 %853
      %855 = vrot.lane.b32.xlu0 %v696, 96
      %v856 = vpop.permute.xlu0 %855
      %857 = vrot.lane.b32.xlu0 %v702, 96
      %v858 = vpop.permute.xlu0 %857
      %859 = vrot.lane.b32.xlu0 %v708, 96
      %v860 = vpop.permute.xlu0 %859
      %861 = vrot.lane.b32.xlu0 %v714, 96
      %v862 = vpop.permute.xlu0 %861
      %v863 = vsel %vm427, %v848, 0
      %v865 = vsel %vm427, %v850, 0
      %v867 = vsel %vm427, %v852, 0
      %v869 = vsel %vm427, %v854, 0
      %v871 = vsel %vm427, %v856, 0
      %v873 = vsel %vm427, %v858, 0
      %v875 = vsel %vm427, %v860, 0
      %v877 = vsel %vm427, %v862, 0
      %879 = vmatprep.subr.mxu0 0.0
      %880 = vmatpush1.xpose.msra.mxu0 %v582
      %881 = vmatprep.subr.mxu0 0.0
      %882 = vmatpush1.xpose.msra.mxu0 %v585
      %883 = vmatprep.subr.mxu0 0.0
      %884 = vmatpush1.xpose.msra.mxu0 %v588
      %885 = vmatprep.subr.mxu0 0.0
      %886 = vmatpush1.xpose.msra.mxu0 %v591
      %887 = vmatprep.subr.mxu0 0.0
      %888 = vmatpush1.xpose.msra.mxu0 %v594
      %889 = vmatprep.subr.mxu0 0.0
      %890 = vmatpush1.xpose.msra.mxu0 %v597
      %891 = vmatprep.subr.mxu0 0.0
      %892 = vmatpush1.xpose.msra.mxu0 %v600
      %893 = vmatprep.subr.mxu0 0.0
      %894 = vmatpush1.xpose.msra.mxu0 %v603
      %895 = vmatprep.subr.mxu0 0.0
      %896 = vmatpush1.xpose.msra.mxu0 0.0
      %897 = vmatprep.subr.mxu0 0.0
      %898 = vmatpush1.xpose.msra.mxu0 0.0
      %899 = vmatprep.subr.mxu0 0.0
      %900 = vmatpush1.xpose.msra.mxu0 0.0
      %901 = vmatprep.subr.mxu0 0.0
      %902 = vmatpush1.xpose.msra.mxu0 0.0
      %903 = vmatprep.subr.mxu0 0.0
      %904 = vmatpush1.xpose.msra.mxu0 0.0
      %905 = vmatprep.subr.mxu0 0.0
      %906 = vmatpush1.xpose.msra.mxu0 0.0
      %907 = vmatprep.subr.mxu0 0.0
      %908 = vmatpush1.xpose.msra.mxu0 0.0
      %909 = vmatprep.subr.mxu0 0.0
      %910 = vmatpush1.xpose.msra.mxu0 0.0
      %911 = vmatprep.subr.mxu0 0.0
      %912 = vmatpush1.xpose.msra.mxu0 0.0
      %913 = vmatprep.subr.mxu0 0.0
      %914 = vmatpush1.xpose.msra.mxu0 0.0
      %915 = vmatprep.subr.mxu0 0.0
      %916 = vmatpush1.xpose.msra.mxu0 0.0
      %917 = vmatprep.subr.mxu0 0.0
      %918 = vmatpush1.xpose.msra.mxu0 0.0
      %919 = vmatprep.subr.mxu0 0.0
      %920 = vmatpush1.xpose.msra.mxu0 0.0
      %921 = vmatprep.subr.mxu0 0.0
      %922 = vmatpush1.xpose.msra.mxu0 0.0
      %923 = vmatprep.subr.mxu0 0.0
      %924 = vmatpush1.xpose.msra.mxu0 0.0
      %925 = vmatprep.subr.mxu0 0.0
      %926 = vmatpush1.xpose.msra.mxu0 0.0
      %927 = vmatprep.subr.mxu0 0.0
      %928 = vmatpush1.xpose.msra.mxu0 0.0
      %929 = vmatprep.subr.mxu0 0.0
      %930 = vmatpush1.xpose.msra.mxu0 0.0
      %931 = vmatprep.subr.mxu0 0.0
      %932 = vmatpush1.xpose.msra.mxu0 0.0
      %933 = vmatprep.subr.mxu0 0.0
      %934 = vmatpush1.xpose.msra.mxu0 0.0
      %935 = vmatprep.subr.mxu0 0.0
      %936 = vmatpush1.xpose.msra.mxu0 0.0
      %937 = vmatprep.subr.mxu0 0.0
      %938 = vmatpush1.xpose.msra.mxu0 0.0
      %939 = vmatprep.subr.mxu0 0.0
      %940 = vmatpush1.xpose.msra.mxu0 0.0
      %941 = vmatprep.subr.mxu0 0.0
      %942 = vmatpush1.xpose.msra.mxu0 0.0
      %943 = vmatprep.mubr.f32.mxu0 0.0
      %944 = vmatmul.mubr.f32.gmra.mrb[0].mxu0 %v863
      %v945 = vpop.f32.mrb[0].mxu0
      %v946 = vadd.f32 0.0, %v945
      %v947 = vpop.f32.mrb[0].mxu0
      %948 = vmatprep.mubr.f32.mxu0 0.0
      %949 = vmatmul.mubr.f32.gmra.mrb[0].mxu0 %v865
      %v950 = vpop.f32.mrb[0].mxu0
      %v951 = vadd.f32 0.0, %v950
      %v952 = vpop.f32.mrb[0].mxu0
      %953 = vmatprep.mubr.f32.mxu0 0.0
      %954 = vmatmul.mubr.f32.gmra.mrb[0].mxu0 %v867
      %v955 = vpop.f32.mrb[0].mxu0
      %v956 = vadd.f32 0.0, %v955
      %v957 = vpop.f32.mrb[0].mxu0
      %958 = vmatprep.mubr.f32.mxu0 0.0
      %959 = vmatmul.mubr.f32.gmra.mrb[0].mxu0 %v869
      %v960 = vpop.f32.mrb[0].mxu0
      %v961 = vadd.f32 0.0, %v960
      %v962 = vpop.f32.mrb[0].mxu0
      %963 = vmatprep.mubr.f32.mxu0 0.0
      %964 = vmatmul.mubr.f32.gmra.mrb[0].mxu0 %v871
      %v965 = vpop.f32.mrb[0].mxu0
      %v966 = vadd.f32 0.0, %v965
      %v967 = vpop.f32.mrb[0].mxu0
      %968 = vmatprep.mubr.f32.mxu0 0.0
      %969 = vmatmul.mubr.f32.gmra.mrb[0].mxu0 %v873
      %v970 = vpop.f32.mrb[0].mxu0
      %v971 = vadd.f32 0.0, %v970
      %v972 = vpop.f32.mrb[0].mxu0
      %973 = vmatprep.mubr.f32.mxu0 0.0
      %974 = vmatmul.mubr.f32.gmra.mrb[0].mxu0 %v875
      %v975 = vpop.f32.mrb[0].mxu0
      %v976 = vadd.f32 0.0, %v975
      %v977 = vpop.f32.mrb[0].mxu0
      %978 = vmatprep.mubr.f32.mxu0 0.0
      %979 = vmatmul.mubr.f32.gmra.mrb[0].mxu0 %v877
      %v980 = vpop.f32.mrb[0].mxu0
      %v981 = vadd.f32 0.0, %v980
      %v982 = vpop.f32.mrb[0].mxu0
      %983 = vdwg.mxu0
      %984 = vrot.lane.b32.xlu0 %v672, 64
      %v985 = vpop.permute.xlu0 %984
      %986 = vrot.lane.b32.xlu0 %v678, 64
      %v987 = vpop.permute.xlu0 %986
      %988 = vrot.lane.b32.xlu0 %v684, 64
      %v989 = vpop.permute.xlu0 %988
      %990 = vrot.lane.b32.xlu0 %v690, 64
      %v991 = vpop.permute.xlu0 %990
      %992 = vrot.lane.b32.xlu0 %v696, 64
      %v993 = vpop.permute.xlu0 %992
      %994 = vrot.lane.b32.xlu0 %v702, 64
      %v995 = vpop.permute.xlu0 %994
      %996 = vrot.lane.b32.xlu0 %v708, 64
      %v997 = vpop.permute.xlu0 %996
      %998 = vrot.lane.b32.xlu0 %v714, 64
      %v999 = vpop.permute.xlu0 %998
      %v1000 = vsel %vm427, %v985, 0
      %v1002 = vsel %vm427, %v987, 0
      %v1004 = vsel %vm427, %v989, 0
      %v1006 = vsel %vm427, %v991, 0
      %v1008 = vsel %vm427, %v993, 0
      %v1010 = vsel %vm427, %v995, 0
      %v1012 = vsel %vm427, %v997, 0
      %v1014 = vsel %vm427, %v999, 0
      %1016 = vmatprep.subr.mxu0 0.0
      %1017 = vmatpush1.xpose.msra.mxu0 %v582
      %1018 = vmatprep.subr.mxu0 0.0
      %1019 = vmatpush1.xpose.msra.mxu0 %v585
      %1020 = vmatprep.subr.mxu0 0.0
      %1021 = vmatpush1.xpose.msra.mxu0 %v588
      %1022 = vmatprep.subr.mxu0 0.0
      %1023 = vmatpush1.xpose.msra.mxu0 %v591
      %1024 = vmatprep.subr.mxu0 0.0
      %1025 = vmatpush1.xpose.msra.mxu0 %v594
      %1026 = vmatprep.subr.mxu0 0.0
      %1027 = vmatpush1.xpose.msra.mxu0 %v597
      %1028 = vmatprep.subr.mxu0 0.0
      %1029 = vmatpush1.xpose.msra.mxu0 %v600
      %1030 = vmatprep.subr.mxu0 0.0
      %1031 = vmatpush1.xpose.msra.mxu0 %v603
      %1032 = vmatprep.subr.mxu0 0.0
      %1033 = vmatpush1.xpose.msra.mxu0 0.0
      %1034 = vmatprep.subr.mxu0 0.0
      %1035 = vmatpush1.xpose.msra.mxu0 0.0
      %1036 = vmatprep.subr.mxu0 0.0
      %1037 = vmatpush1.xpose.msra.mxu0 0.0
      %1038 = vmatprep.subr.mxu0 0.0
      %1039 = vmatpush1.xpose.msra.mxu0 0.0
      %1040 = vmatprep.subr.mxu0 0.0
      %1041 = vmatpush1.xpose.msra.mxu0 0.0
      %1042 = vmatprep.subr.mxu0 0.0
      %1043 = vmatpush1.xpose.msra.mxu0 0.0
      %1044 = vmatprep.subr.mxu0 0.0
      %1045 = vmatpush1.xpose.msra.mxu0 0.0
      %1046 = vmatprep.subr.mxu0 0.0
      %1047 = vmatpush1.xpose.msra.mxu0 0.0
      %1048 = vmatprep.subr.mxu0 0.0
      %1049 = vmatpush1.xpose.msra.mxu0 0.0
      %1050 = vmatprep.subr.mxu0 0.0
      %1051 = vmatpush1.xpose.msra.mxu0 0.0
      %1052 = vmatprep.subr.mxu0 0.0
      %1053 = vmatpush1.xpose.msra.mxu0 0.0
      %1054 = vmatprep.subr.mxu0 0.0
      %1055 = vmatpush1.xpose.msra.mxu0 0.0
      %1056 = vmatprep.subr.mxu0 0.0
      %1057 = vmatpush1.xpose.msra.mxu0 0.0
      %1058 = vmatprep.subr.mxu0 0.0
      %1059 = vmatpush1.xpose.msra.mxu0 0.0
      %1060 = vmatprep.subr.mxu0 0.0
      %1061 = vmatpush1.xpose.msra.mxu0 0.0
      %1062 = vmatprep.subr.mxu0 0.0
      %1063 = vmatpush1.xpose.msra.mxu0 0.0
      %1064 = vmatprep.subr.mxu0 0.0
      %1065 = vmatpush1.xpose.msra.mxu0 0.0
      %1066 = vmatprep.subr.mxu0 0.0
      %1067 = vmatpush1.xpose.msra.mxu0 0.0
      %1068 = vmatprep.subr.mxu0 0.0
      %1069 = vmatpush1.xpose.msra.mxu0 0.0
      %1070 = vmatprep.subr.mxu0 0.0
      %1071 = vmatpush1.xpose.msra.mxu0 0.0
      %1072 = vmatprep.subr.mxu0 0.0
      %1073 = vmatpush1.xpose.msra.mxu0 0.0
      %1074 = vmatprep.subr.mxu0 0.0
      %1075 = vmatpush1.xpose.msra.mxu0 0.0
      %1076 = vmatprep.subr.mxu0 0.0
      %1077 = vmatpush1.xpose.msra.mxu0 0.0
      %1078 = vmatprep.subr.mxu0 0.0
      %1079 = vmatpush1.xpose.msra.mxu0 0.0
      %1080 = vmatprep.mubr.f32.mxu0 0.0
      %1081 = vmatmul.mubr.f32.gmra.mrb[0].mxu0 %v1000
      %v1082 = vpop.f32.mrb[0].mxu0
      %v1083 = vadd.f32 0.0, %v1082
      %v1084 = vpop.f32.mrb[0].mxu0
      %1085 = vmatprep.mubr.f32.mxu0 0.0
      %1086 = vmatmul.mubr.f32.gmra.mrb[0].mxu0 %v1002
      %v1087 = vpop.f32.mrb[0].mxu0
      %v1088 = vadd.f32 0.0, %v1087
      %v1089 = vpop.f32.mrb[0].mxu0
      %1090 = vmatprep.mubr.f32.mxu0 0.0
      %1091 = vmatmul.mubr.f32.gmra.mrb[0].mxu0 %v1004
      %v1092 = vpop.f32.mrb[0].mxu0
      %v1093 = vadd.f32 0.0, %v1092
      %v1094 = vpop.f32.mrb[0].mxu0
      %1095 = vmatprep.mubr.f32.mxu0 0.0
      %1096 = vmatmul.mubr.f32.gmra.mrb[0].mxu0 %v1006
      %v1097 = vpop.f32.mrb[0].mxu0
      %v1098 = vadd.f32 0.0, %v1097
      %v1099 = vpop.f32.mrb[0].mxu0
      %1100 = vmatprep.mubr.f32.mxu0 0.0
      %1101 = vmatmul.mubr.f32.gmra.mrb[0].mxu0 %v1008
      %v1102 = vpop.f32.mrb[0].mxu0
      %v1103 = vadd.f32 0.0, %v1102
      %v1104 = vpop.f32.mrb[0].mxu0
      %1105 = vmatprep.mubr.f32.mxu0 0.0
      %1106 = vmatmul.mubr.f32.gmra.mrb[0].mxu0 %v1010
      %v1107 = vpop.f32.mrb[0].mxu0
      %v1108 = vadd.f32 0.0, %v1107
      %v1109 = vpop.f32.mrb[0].mxu0
      %1110 = vmatprep.mubr.f32.mxu0 0.0
      %1111 = vmatmul.mubr.f32.gmra.mrb[0].mxu0 %v1012
      %v1112 = vpop.f32.mrb[0].mxu0
      %v1113 = vadd.f32 0.0, %v1112
      %v1114 = vpop.f32.mrb[0].mxu0
      %1115 = vmatprep.mubr.f32.mxu0 0.0
      %1116 = vmatmul.mubr.f32.gmra.mrb[0].mxu0 %v1014
      %v1117 = vpop.f32.mrb[0].mxu0
      %v1118 = vadd.f32 0.0, %v1117
      %v1119 = vpop.f32.mrb[0].mxu0
      %1120 = vdwg.mxu0
      %1121 = vrot.lane.b32.xlu0 %v672, 32
      %v1122 = vpop.permute.xlu0 %1121
      %1123 = vrot.lane.b32.xlu0 %v678, 32
      %v1124 = vpop.permute.xlu0 %1123
      %1125 = vrot.lane.b32.xlu0 %v684, 32
      %v1126 = vpop.permute.xlu0 %1125
      %1127 = vrot.lane.b32.xlu0 %v690, 32
      %v1128 = vpop.permute.xlu0 %1127
      %1129 = vrot.lane.b32.xlu0 %v696, 32
      %v1130 = vpop.permute.xlu0 %1129
      %1131 = vrot.lane.b32.xlu0 %v702, 32
      %v1132 = vpop.permute.xlu0 %1131
      %1133 = vrot.lane.b32.xlu0 %v708, 32
      %v1134 = vpop.permute.xlu0 %1133
      %1135 = vrot.lane.b32.xlu0 %v714, 32
      %v1136 = vpop.permute.xlu0 %1135
      %v1137 = vsel %vm427, %v1122, 0
      %v1139 = vsel %vm427, %v1124, 0
      %v1141 = vsel %vm427, %v1126, 0
      %v1143 = vsel %vm427, %v1128, 0
      %v1145 = vsel %vm427, %v1130, 0
      %v1147 = vsel %vm427, %v1132, 0
      %v1149 = vsel %vm427, %v1134, 0
      %v1151 = vsel %vm427, %v1136, 0
      %1153 = vmatprep.subr.mxu0 0.0
      %1154 = vmatpush1.xpose.msra.mxu0 %v582
      %1155 = vmatprep.subr.mxu0 0.0
      %1156 = vmatpush1.xpose.msra.mxu0 %v585
      %1157 = vmatprep.subr.mxu0 0.0
      %1158 = vmatpush1.xpose.msra.mxu0 %v588
      %1159 = vmatprep.subr.mxu0 0.0
      %1160 = vmatpush1.xpose.msra.mxu0 %v591
      %1161 = vmatprep.subr.mxu0 0.0
      %1162 = vmatpush1.xpose.msra.mxu0 %v594
      %1163 = vmatprep.subr.mxu0 0.0
      %1164 = vmatpush1.xpose.msra.mxu0 %v597
      %1165 = vmatprep.subr.mxu0 0.0
      %1166 = vmatpush1.xpose.msra.mxu0 %v600
      %1167 = vmatprep.subr.mxu0 0.0
      %1168 = vmatpush1.xpose.msra.mxu0 %v603
      %1169 = vmatprep.subr.mxu0 0.0
      %1170 = vmatpush1.xpose.msra.mxu0 0.0
      %1171 = vmatprep.subr.mxu0 0.0
      %1172 = vmatpush1.xpose.msra.mxu0 0.0
      %1173 = vmatprep.subr.mxu0 0.0
      %1174 = vmatpush1.xpose.msra.mxu0 0.0
      %1175 = vmatprep.subr.mxu0 0.0
      %1176 = vmatpush1.xpose.msra.mxu0 0.0
      %1177 = vmatprep.subr.mxu0 0.0
      %1178 = vmatpush1.xpose.msra.mxu0 0.0
      %1179 = vmatprep.subr.mxu0 0.0
      %1180 = vmatpush1.xpose.msra.mxu0 0.0
      %1181 = vmatprep.subr.mxu0 0.0
      %1182 = vmatpush1.xpose.msra.mxu0 0.0
      %1183 = vmatprep.subr.mxu0 0.0
      %1184 = vmatpush1.xpose.msra.mxu0 0.0
      %1185 = vmatprep.subr.mxu0 0.0
      %1186 = vmatpush1.xpose.msra.mxu0 0.0
      %1187 = vmatprep.subr.mxu0 0.0
      %1188 = vmatpush1.xpose.msra.mxu0 0.0
      %1189 = vmatprep.subr.mxu0 0.0
      %1190 = vmatpush1.xpose.msra.mxu0 0.0
      %1191 = vmatprep.subr.mxu0 0.0
      %1192 = vmatpush1.xpose.msra.mxu0 0.0
      %1193 = vmatprep.subr.mxu0 0.0
      %1194 = vmatpush1.xpose.msra.mxu0 0.0
      %1195 = vmatprep.subr.mxu0 0.0
      %1196 = vmatpush1.xpose.msra.mxu0 0.0
      %1197 = vmatprep.subr.mxu0 0.0
      %1198 = vmatpush1.xpose.msra.mxu0 0.0
      %1199 = vmatprep.subr.mxu0 0.0
      %1200 = vmatpush1.xpose.msra.mxu0 0.0
      %1201 = vmatprep.subr.mxu0 0.0
      %1202 = vmatpush1.xpose.msra.mxu0 0.0
      %1203 = vmatprep.subr.mxu0 0.0
      %1204 = vmatpush1.xpose.msra.mxu0 0.0
      %1205 = vmatprep.subr.mxu0 0.0
      %1206 = vmatpush1.xpose.msra.mxu0 0.0
      %1207 = vmatprep.subr.mxu0 0.0
      %1208 = vmatpush1.xpose.msra.mxu0 0.0
      %1209 = vmatprep.subr.mxu0 0.0
      %1210 = vmatpush1.xpose.msra.mxu0 0.0
      %1211 = vmatprep.subr.mxu0 0.0
      %1212 = vmatpush1.xpose.msra.mxu0 0.0
      %1213 = vmatprep.subr.mxu0 0.0
      %1214 = vmatpush1.xpose.msra.mxu0 0.0
      %1215 = vmatprep.subr.mxu0 0.0
      %1216 = vmatpush1.xpose.msra.mxu0 0.0
      %1217 = vmatprep.mubr.f32.mxu0 0.0
      %1218 = vmatmul.mubr.f32.gmra.mrb[0].mxu0 %v1137
      %v1219 = vpop.f32.mrb[0].mxu0
      %v1220 = vadd.f32 0.0, %v1219
      %v1221 = vpop.f32.mrb[0].mxu0
      %1222 = vmatprep.mubr.f32.mxu0 0.0
      %1223 = vmatmul.mubr.f32.gmra.mrb[0].mxu0 %v1139
      %v1224 = vpop.f32.mrb[0].mxu0
      %v1225 = vadd.f32 0.0, %v1224
      %v1226 = vpop.f32.mrb[0].mxu0
      %1227 = vmatprep.mubr.f32.mxu0 0.0
      %1228 = vmatmul.mubr.f32.gmra.mrb[0].mxu0 %v1141
      %v1229 = vpop.f32.mrb[0].mxu0
      %v1230 = vadd.f32 0.0, %v1229
      %v1231 = vpop.f32.mrb[0].mxu0
      %1232 = vmatprep.mubr.f32.mxu0 0.0
      %1233 = vmatmul.mubr.f32.gmra.mrb[0].mxu0 %v1143
      %v1234 = vpop.f32.mrb[0].mxu0
      %v1235 = vadd.f32 0.0, %v1234
      %v1236 = vpop.f32.mrb[0].mxu0
      %1237 = vmatprep.mubr.f32.mxu0 0.0
      %1238 = vmatmul.mubr.f32.gmra.mrb[0].mxu0 %v1145
      %v1239 = vpop.f32.mrb[0].mxu0
      %v1240 = vadd.f32 0.0, %v1239
      %v1241 = vpop.f32.mrb[0].mxu0
      %1242 = vmatprep.mubr.f32.mxu0 0.0
      %1243 = vmatmul.mubr.f32.gmra.mrb[0].mxu0 %v1147
      %v1244 = vpop.f32.mrb[0].mxu0
      %v1245 = vadd.f32 0.0, %v1244
      %v1246 = vpop.f32.mrb[0].mxu0
      %1247 = vmatprep.mubr.f32.mxu0 0.0
      %1248 = vmatmul.mubr.f32.gmra.mrb[0].mxu0 %v1149
      %v1249 = vpop.f32.mrb[0].mxu0
      %v1250 = vadd.f32 0.0, %v1249
      %v1251 = vpop.f32.mrb[0].mxu0
      %1252 = vmatprep.mubr.f32.mxu0 0.0
      %1253 = vmatmul.mubr.f32.gmra.mrb[0].mxu0 %v1151
      %v1254 = vpop.f32.mrb[0].mxu0
      %v1255 = vadd.f32 0.0, %v1254
      %v1256 = vpop.f32.mrb[0].mxu0
      %1257 = vdwg.mxu0
      %vm1258 = vcmask 523264
      %v1259 = vsel %vm1258, %v809, -inf
      %1260 = vmax.xlane.f32.xlu0 %v1259
      %v1261 = vpop.xlane.xlu0 %1260
      %v1262 = vsel %vm1258, %v814, -inf
      %1263 = vmax.xlane.f32.xlu0 %v1262
      %v1264 = vpop.xlane.xlu0 %1263
      %v1265 = vsel %vm1258, %v819, -inf
      %1266 = vmax.xlane.f32.xlu0 %v1265
      %v1267 = vpop.xlane.xlu0 %1266
      %v1268 = vsel %vm1258, %v824, -inf
      %1269 = vmax.xlane.f32.xlu0 %v1268
      %v1270 = vpop.xlane.xlu0 %1269
      %v1271 = vsel %vm1258, %v829, -inf
      %1272 = vmax.xlane.f32.xlu0 %v1271
      %v1273 = vpop.xlane.xlu0 %1272
      %v1274 = vsel %vm1258, %v834, -inf
      %1275 = vmax.xlane.f32.xlu0 %v1274
      %v1276 = vpop.xlane.xlu0 %1275
      %v1277 = vsel %vm1258, %v839, -inf
      %1278 = vmax.xlane.f32.xlu0 %v1277
      %v1279 = vpop.xlane.xlu0 %1278
      %v1280 = vsel %vm1258, %v844, -inf
      %1281 = vmax.xlane.f32.xlu0 %v1280
      %v1282 = vpop.xlane.xlu0 %1281
      %v1283 = vsel %vm1258, %v946, -inf
      %1284 = vmax.xlane.f32.xlu0 %v1283
      %v1285 = vpop.xlane.xlu0 %1284
      %v1286 = vsel %vm1258, %v951, -inf
      %1287 = vmax.xlane.f32.xlu0 %v1286
      %v1288 = vpop.xlane.xlu0 %1287
      %v1289 = vsel %vm1258, %v956, -inf
      %1290 = vmax.xlane.f32.xlu0 %v1289
      %v1291 = vpop.xlane.xlu0 %1290
      %v1292 = vsel %vm1258, %v961, -inf
      %1293 = vmax.xlane.f32.xlu0 %v1292
      %v1294 = vpop.xlane.xlu0 %1293
      %v1295 = vsel %vm1258, %v966, -inf
      %1296 = vmax.xlane.f32.xlu0 %v1295
      %v1297 = vpop.xlane.xlu0 %1296
      %v1298 = vsel %vm1258, %v971, -inf
      %1299 = vmax.xlane.f32.xlu0 %v1298
      %v1300 = vpop.xlane.xlu0 %1299
      %v1301 = vsel %vm1258, %v976, -inf
      %1302 = vmax.xlane.f32.xlu0 %v1301
      %v1303 = vpop.xlane.xlu0 %1302
      %v1304 = vsel %vm1258, %v981, -inf
      %1305 = vmax.xlane.f32.xlu0 %v1304
      %v1306 = vpop.xlane.xlu0 %1305
      %v1307 = vsel %vm1258, %v1083, -inf
      %1308 = vmax.xlane.f32.xlu0 %v1307
      %v1309 = vpop.xlane.xlu0 %1308
      %v1310 = vsel %vm1258, %v1088, -inf
      %1311 = vmax.xlane.f32.xlu0 %v1310
      %v1312 = vpop.xlane.xlu0 %1311
      %v1313 = vsel %vm1258, %v1093, -inf
      %1314 = vmax.xlane.f32.xlu0 %v1313
      %v1315 = vpop.xlane.xlu0 %1314
      %v1316 = vsel %vm1258, %v1098, -inf
      %1317 = vmax.xlane.f32.xlu0 %v1316
      %v1318 = vpop.xlane.xlu0 %1317
      %v1319 = vsel %vm1258, %v1103, -inf
      %1320 = vmax.xlane.f32.xlu0 %v1319
      %v1321 = vpop.xlane.xlu0 %1320
      %v1322 = vsel %vm1258, %v1108, -inf
      %1323 = vmax.xlane.f32.xlu0 %v1322
      %v1324 = vpop.xlane.xlu0 %1323
      %v1325 = vsel %vm1258, %v1113, -inf
      %1326 = vmax.xlane.f32.xlu0 %v1325
      %v1327 = vpop.xlane.xlu0 %1326
      %v1328 = vsel %vm1258, %v1118, -inf
      %1329 = vmax.xlane.f32.xlu0 %v1328
      %v1330 = vpop.xlane.xlu0 %1329
      %v1331 = vsel %vm1258, %v1220, -inf
      %1332 = vmax.xlane.f32.xlu0 %v1331
      %v1333 = vpop.xlane.xlu0 %1332
      %v1334 = vsel %vm1258, %v1225, -inf
      %1335 = vmax.xlane.f32.xlu0 %v1334
      %v1336 = vpop.xlane.xlu0 %1335
      %v1337 = vsel %vm1258, %v1230, -inf
      %1338 = vmax.xlane.f32.xlu0 %v1337
      %v1339 = vpop.xlane.xlu0 %1338
      %v1340 = vsel %vm1258, %v1235, -inf
      %1341 = vmax.xlane.f32.xlu0 %v1340
      %v1342 = vpop.xlane.xlu0 %1341
      %v1343 = vsel %vm1258, %v1240, -inf
      %1344 = vmax.xlane.f32.xlu0 %v1343
      %v1345 = vpop.xlane.xlu0 %1344
      %v1346 = vsel %vm1258, %v1245, -inf
      %1347 = vmax.xlane.f32.xlu0 %v1346
      %v1348 = vpop.xlane.xlu0 %1347
      %v1349 = vsel %vm1258, %v1250, -inf
      %1350 = vmax.xlane.f32.xlu0 %v1349
      %v1351 = vpop.xlane.xlu0 %1350
      %v1352 = vsel %vm1258, %v1255, -inf
      %1353 = vmax.xlane.f32.xlu0 %v1352
      %v1354 = vpop.xlane.xlu0 %1353
      %v1355 = vsub.f32 %v809, %v1261
      %v1356 = vsub.f32 %v814, %v1264
      %v1357 = vsub.f32 %v819, %v1267
      %v1358 = vsub.f32 %v824, %v1270
      %v1359 = vsub.f32 %v829, %v1273
      %v1360 = vsub.f32 %v834, %v1276
      %v1361 = vsub.f32 %v839, %v1279
      %v1362 = vsub.f32 %v844, %v1282
      %v1363 = vsub.f32 %v946, %v1285
      %v1364 = vsub.f32 %v951, %v1288
      %v1365 = vsub.f32 %v956, %v1291
      %v1366 = vsub.f32 %v961, %v1294
      %v1367 = vsub.f32 %v966, %v1297
      %v1368 = vsub.f32 %v971, %v1300
      %v1369 = vsub.f32 %v976, %v1303
      %v1370 = vsub.f32 %v981, %v1306
      %v1371 = vsub.f32 %v1083, %v1309
      %v1372 = vsub.f32 %v1088, %v1312
      %v1373 = vsub.f32 %v1093, %v1315
      %v1374 = vsub.f32 %v1098, %v1318
      %v1375 = vsub.f32 %v1103, %v1321
      %v1376 = vsub.f32 %v1108, %v1324
      %v1377 = vsub.f32 %v1113, %v1327
      %v1378 = vsub.f32 %v1118, %v1330
      %v1379 = vsub.f32 %v1220, %v1333
      %v1380 = vsub.f32 %v1225, %v1336
      %v1381 = vsub.f32 %v1230, %v1339
      %v1382 = vsub.f32 %v1235, %v1342
      %v1383 = vsub.f32 %v1240, %v1345
      %v1384 = vsub.f32 %v1245, %v1348
      %v1385 = vsub.f32 %v1250, %v1351
      %v1386 = vsub.f32 %v1255, %v1354
      %v1387 = vmul.f32 %v1355, 1.442695
      %v1388 = vpow.pop %v1387
      %v1389 = vmul.f32 %v1356, 1.442695
      %v1390 = vpow.pop %v1389
      %v1391 = vmul.f32 %v1357, 1.442695
      %v1392 = vpow.pop %v1391
      %v1393 = vmul.f32 %v1358, 1.442695
      %v1394 = vpow.pop %v1393
      %v1395 = vmul.f32 %v1359, 1.442695
      %v1396 = vpow.pop %v1395
      %v1397 = vmul.f32 %v1360, 1.442695
      %v1398 = vpow.pop %v1397
      %v1399 = vmul.f32 %v1361, 1.442695
      %v1400 = vpow.pop %v1399
      %v1401 = vmul.f32 %v1362, 1.442695
      %v1402 = vpow.pop %v1401
      %v1403 = vmul.f32 %v1363, 1.442695
      %v1404 = vpow.pop %v1403
      %v1405 = vmul.f32 %v1364, 1.442695
      %v1406 = vpow.pop %v1405
      %v1407 = vmul.f32 %v1365, 1.442695
      %v1408 = vpow.pop %v1407
      %v1409 = vmul.f32 %v1366, 1.442695
      %v1410 = vpow.pop %v1409
      %v1411 = vmul.f32 %v1367, 1.442695
      %v1412 = vpow.pop %v1411
      %v1413 = vmul.f32 %v1368, 1.442695
      %v1414 = vpow.pop %v1413
      %v1415 = vmul.f32 %v1369, 1.442695
      %v1416 = vpow.pop %v1415
      %v1417 = vmul.f32 %v1370, 1.442695
      %v1418 = vpow.pop %v1417
      %v1419 = vmul.f32 %v1371, 1.442695
      %v1420 = vpow.pop %v1419
      %v1421 = vmul.f32 %v1372, 1.442695
      %v1422 = vpow.pop %v1421
      %v1423 = vmul.f32 %v1373, 1.442695
      %v1424 = vpow.pop %v1423
      %v1425 = vmul.f32 %v1374, 1.442695
      %v1426 = vpow.pop %v1425
      %v1427 = vmul.f32 %v1375, 1.442695
      %v1428 = vpow.pop %v1427
      %v1429 = vmul.f32 %v1376, 1.442695
      %v1430 = vpow.pop %v1429
      %v1431 = vmul.f32 %v1377, 1.442695
      %v1432 = vpow.pop %v1431
      %v1433 = vmul.f32 %v1378, 1.442695
      %v1434 = vpow.pop %v1433
      %v1435 = vmul.f32 %v1379, 1.442695
      %v1436 = vpow.pop %v1435
      %v1437 = vmul.f32 %v1380, 1.442695
      %v1438 = vpow.pop %v1437
      %v1439 = vmul.f32 %v1381, 1.442695
      %v1440 = vpow.pop %v1439
      %v1441 = vmul.f32 %v1382, 1.442695
      %v1442 = vpow.pop %v1441
      %v1443 = vmul.f32 %v1383, 1.442695
      %v1444 = vpow.pop %v1443
      %v1445 = vmul.f32 %v1384, 1.442695
      %v1446 = vpow.pop %v1445
      %v1447 = vmul.f32 %v1385, 1.442695
      %v1448 = vpow.pop %v1447
      %v1449 = vmul.f32 %v1386, 1.442695
      %v1450 = vpow.pop %v1449
      %v1451 = vsel %vm1258, %v1388, 0.0
      %1452 = vadd.xlane.f32.xlu0 %v1451
      %v1453 = vpop.xlane.xlu0 %1452
      %v1454 = vsel %vm1258, %v1390, 0.0
      %1455 = vadd.xlane.f32.xlu0 %v1454
      %v1456 = vpop.xlane.xlu0 %1455
      %v1457 = vsel %vm1258, %v1392, 0.0
      %1458 = vadd.xlane.f32.xlu0 %v1457
      %v1459 = vpop.xlane.xlu0 %1458
      %v1460 = vsel %vm1258, %v1394, 0.0
      %1461 = vadd.xlane.f32.xlu0 %v1460
      %v1462 = vpop.xlane.xlu0 %1461
      %v1463 = vsel %vm1258, %v1396, 0.0
      %1464 = vadd.xlane.f32.xlu0 %v1463
      %v1465 = vpop.xlane.xlu0 %1464
      %v1466 = vsel %vm1258, %v1398, 0.0
      %1467 = vadd.xlane.f32.xlu0 %v1466
      %v1468 = vpop.xlane.xlu0 %1467
      %v1469 = vsel %vm1258, %v1400, 0.0
      %1470 = vadd.xlane.f32.xlu0 %v1469
      %v1471 = vpop.xlane.xlu0 %1470
      %v1472 = vsel %vm1258, %v1402, 0.0
      %1473 = vadd.xlane.f32.xlu0 %v1472
      %v1474 = vpop.xlane.xlu0 %1473
      %v1475 = vsel %vm1258, %v1404, 0.0
      %1476 = vadd.xlane.f32.xlu0 %v1475
      %v1477 = vpop.xlane.xlu0 %1476
      %v1478 = vsel %vm1258, %v1406, 0.0
      %1479 = vadd.xlane.f32.xlu0 %v1478
      %v1480 = vpop.xlane.xlu0 %1479
      %v1481 = vsel %vm1258, %v1408, 0.0
      %1482 = vadd.xlane.f32.xlu0 %v1481
      %v1483 = vpop.xlane.xlu0 %1482
      %v1484 = vsel %vm1258, %v1410, 0.0
      %1485 = vadd.xlane.f32.xlu0 %v1484
      %v1486 = vpop.xlane.xlu0 %1485
      %v1487 = vsel %vm1258, %v1412, 0.0
      %1488 = vadd.xlane.f32.xlu0 %v1487
      %v1489 = vpop.xlane.xlu0 %1488
      %v1490 = vsel %vm1258, %v1414, 0.0
      %1491 = vadd.xlane.f32.xlu0 %v1490
      %v1492 = vpop.xlane.xlu0 %1491
      %v1493 = vsel %vm1258, %v1416, 0.0
      %1494 = vadd.xlane.f32.xlu0 %v1493
      %v1495 = vpop.xlane.xlu0 %1494
      %v1496 = vsel %vm1258, %v1418, 0.0
      %1497 = vadd.xlane.f32.xlu0 %v1496
      %v1498 = vpop.xlane.xlu0 %1497
      %v1499 = vsel %vm1258, %v1420, 0.0
      %1500 = vadd.xlane.f32.xlu0 %v1499
      %v1501 = vpop.xlane.xlu0 %1500
      %v1502 = vsel %vm1258, %v1422, 0.0
      %1503 = vadd.xlane.f32.xlu0 %v1502
      %v1504 = vpop.xlane.xlu0 %1503
      %v1505 = vsel %vm1258, %v1424, 0.0
      %1506 = vadd.xlane.f32.xlu0 %v1505
      %v1507 = vpop.xlane.xlu0 %1506
      %v1508 = vsel %vm1258, %v1426, 0.0
      %1509 = vadd.xlane.f32.xlu0 %v1508
      %v1510 = vpop.xlane.xlu0 %1509
      %v1511 = vsel %vm1258, %v1428, 0.0
      %1512 = vadd.xlane.f32.xlu0 %v1511
      %v1513 = vpop.xlane.xlu0 %1512
      %v1514 = vsel %vm1258, %v1430, 0.0
      %1515 = vadd.xlane.f32.xlu0 %v1514
      %v1516 = vpop.xlane.xlu0 %1515
      %v1517 = vsel %vm1258, %v1432, 0.0
      %1518 = vadd.xlane.f32.xlu0 %v1517
      %v1519 = vpop.xlane.xlu0 %1518
      %v1520 = vsel %vm1258, %v1434, 0.0
      %1521 = vadd.xlane.f32.xlu0 %v1520
      %v1522 = vpop.xlane.xlu0 %1521
      %v1523 = vsel %vm1258, %v1436, 0.0
      %1524 = vadd.xlane.f32.xlu0 %v1523
      %v1525 = vpop.xlane.xlu0 %1524
      %v1526 = vsel %vm1258, %v1438, 0.0
      %1527 = vadd.xlane.f32.xlu0 %v1526
      %v1528 = vpop.xlane.xlu0 %1527
      %v1529 = vsel %vm1258, %v1440, 0.0
      %1530 = vadd.xlane.f32.xlu0 %v1529
      %v1531 = vpop.xlane.xlu0 %1530
      %v1532 = vsel %vm1258, %v1442, 0.0
      %1533 = vadd.xlane.f32.xlu0 %v1532
      %v1534 = vpop.xlane.xlu0 %1533
      %v1535 = vsel %vm1258, %v1444, 0.0
      %1536 = vadd.xlane.f32.xlu0 %v1535
      %v1537 = vpop.xlane.xlu0 %1536
      %v1538 = vsel %vm1258, %v1446, 0.0
      %1539 = vadd.xlane.f32.xlu0 %v1538
      %v1540 = vpop.xlane.xlu0 %1539
      %v1541 = vsel %vm1258, %v1448, 0.0
      %1542 = vadd.xlane.f32.xlu0 %v1541
      %v1543 = vpop.xlane.xlu0 %1542
      %v1544 = vsel %vm1258, %v1450, 0.0
      %1545 = vadd.xlane.f32.xlu0 %v1544
      %v1546 = vpop.xlane.xlu0 %1545
      %v1547 = vrcp.pop %v1453
      %v1548 = vrcp.pop %v1456
      %v1549 = vrcp.pop %v1459
      %v1550 = vrcp.pop %v1462
      %v1551 = vrcp.pop %v1465
      %v1552 = vrcp.pop %v1468
      %v1553 = vrcp.pop %v1471
      %v1554 = vrcp.pop %v1474
      %v1555 = vrcp.pop %v1477
      %v1556 = vrcp.pop %v1480
      %v1557 = vrcp.pop %v1483
      %v1558 = vrcp.pop %v1486
      %v1559 = vrcp.pop %v1489
      %v1560 = vrcp.pop %v1492
      %v1561 = vrcp.pop %v1495
      %v1562 = vrcp.pop %v1498
      %v1563 = vrcp.pop %v1501
      %v1564 = vrcp.pop %v1504
      %v1565 = vrcp.pop %v1507
      %v1566 = vrcp.pop %v1510
      %v1567 = vrcp.pop %v1513
      %v1568 = vrcp.pop %v1516
      %v1569 = vrcp.pop %v1519
      %v1570 = vrcp.pop %v1522
      %v1571 = vrcp.pop %v1525
      %v1572 = vrcp.pop %v1528
      %v1573 = vrcp.pop %v1531
      %v1574 = vrcp.pop %v1534
      %v1575 = vrcp.pop %v1537
      %v1576 = vrcp.pop %v1540
      %v1577 = vrcp.pop %v1543
      %v1578 = vrcp.pop %v1546
      %v1579 = vmul.f32 %v1388, %v1547
      %v1580 = vmul.f32 %v1390, %v1548
      %v1581 = vmul.f32 %v1392, %v1549
      %v1582 = vmul.f32 %v1394, %v1550
      %v1583 = vmul.f32 %v1396, %v1551
      %v1584 = vmul.f32 %v1398, %v1552
      %v1585 = vmul.f32 %v1400, %v1553
      %v1586 = vmul.f32 %v1402, %v1554
      %v1587 = vmul.f32 %v1404, %v1555
      %v1588 = vmul.f32 %v1406, %v1556
      %v1589 = vmul.f32 %v1408, %v1557
      %v1590 = vmul.f32 %v1410, %v1558
      %v1591 = vmul.f32 %v1412, %v1559
      %v1592 = vmul.f32 %v1414, %v1560
      %v1593 = vmul.f32 %v1416, %v1561
      %v1594 = vmul.f32 %v1418, %v1562
      %v1595 = vmul.f32 %v1420, %v1563
      %v1596 = vmul.f32 %v1422, %v1564
      %v1597 = vmul.f32 %v1424, %v1565
      %v1598 = vmul.f32 %v1426, %v1566
      %v1599 = vmul.f32 %v1428, %v1567
      %v1600 = vmul.f32 %v1430, %v1568
      %v1601 = vmul.f32 %v1432, %v1569
      %v1602 = vmul.f32 %v1434, %v1570
      %v1603 = vmul.f32 %v1436, %v1571
      %v1604 = vmul.f32 %v1438, %v1572
      %v1605 = vmul.f32 %v1440, %v1573
      %v1606 = vmul.f32 %v1442, %v1574
      %v1607 = vmul.f32 %v1444, %v1575
      %v1608 = vmul.f32 %v1446, %v1576
      %v1609 = vmul.f32 %v1448, %v1577
      %v1610 = vmul.f32 %v1450, %v1578
      %1619 = vrot.lane.b32.xlu0 %v1587, 64
      %v1620 = vpop.permute.xlu0 %1619
      %1621 = vrot.lane.b32.xlu0 %v1588, 64
      %v1622 = vpop.permute.xlu0 %1621
      %1623 = vrot.lane.b32.xlu0 %v1589, 64
      %v1624 = vpop.permute.xlu0 %1623
      %1625 = vrot.lane.b32.xlu0 %v1590, 64
      %v1626 = vpop.permute.xlu0 %1625
      %1627 = vrot.lane.b32.xlu0 %v1591, 64
      %v1628 = vpop.permute.xlu0 %1627
      %1629 = vrot.lane.b32.xlu0 %v1592, 64
      %v1630 = vpop.permute.xlu0 %1629
      %1631 = vrot.lane.b32.xlu0 %v1593, 64
      %v1632 = vpop.permute.xlu0 %1631
      %1633 = vrot.lane.b32.xlu0 %v1594, 64
      %v1634 = vpop.permute.xlu0 %1633
      %1651 = vrot.lane.b32.xlu0 %v1603, 64
      %v1652 = vpop.permute.xlu0 %1651
      %1653 = vrot.lane.b32.xlu0 %v1604, 64
      %v1654 = vpop.permute.xlu0 %1653
      %1655 = vrot.lane.b32.xlu0 %v1605, 64
      %v1656 = vpop.permute.xlu0 %1655
      %1657 = vrot.lane.b32.xlu0 %v1606, 64
      %v1658 = vpop.permute.xlu0 %1657
      %1659 = vrot.lane.b32.xlu0 %v1607, 64
      %v1660 = vpop.permute.xlu0 %1659
      %1661 = vrot.lane.b32.xlu0 %v1608, 64
      %v1662 = vpop.permute.xlu0 %1661
      %1663 = vrot.lane.b32.xlu0 %v1609, 64
      %v1664 = vpop.permute.xlu0 %1663
      %1665 = vrot.lane.b32.xlu0 %v1610, 64
      %v1666 = vpop.permute.xlu0 %1665
      %v1675 = vsel %vm1258, %v1579, %v1620
      %v1676 = vsel %vm1258, %v1580, %v1622
      %v1677 = vsel %vm1258, %v1581, %v1624
      %v1678 = vsel %vm1258, %v1582, %v1626
      %v1679 = vsel %vm1258, %v1583, %v1628
      %v1680 = vsel %vm1258, %v1584, %v1630
      %v1681 = vsel %vm1258, %v1585, %v1632
      %v1682 = vsel %vm1258, %v1586, %v1634
      %v1683 = vsel %vm1258, %v1595, %v1652
      %v1684 = vsel %vm1258, %v1596, %v1654
      %v1685 = vsel %vm1258, %v1597, %v1656
      %v1686 = vsel %vm1258, %v1598, %v1658
      %v1687 = vsel %vm1258, %v1599, %v1660
      %v1688 = vsel %vm1258, %v1600, %v1662
      %v1689 = vsel %vm1258, %v1601, %v1664
      %v1690 = vsel %vm1258, %v1602, %v1666
      %1699 = vrot.lane.b32.xlu0 %v674, 96
      %v1700 = vpop.permute.xlu0 %1699
      %1701 = vrot.lane.b32.xlu0 %v680, 96
      %v1702 = vpop.permute.xlu0 %1701
      %1703 = vrot.lane.b32.xlu0 %v686, 96
      %v1704 = vpop.permute.xlu0 %1703
      %1705 = vrot.lane.b32.xlu0 %v692, 96
      %v1706 = vpop.permute.xlu0 %1705
      %1707 = vrot.lane.b32.xlu0 %v698, 96
      %v1708 = vpop.permute.xlu0 %1707
      %1709 = vrot.lane.b32.xlu0 %v704, 96
      %v1710 = vpop.permute.xlu0 %1709
      %1711 = vrot.lane.b32.xlu0 %v710, 96
      %v1712 = vpop.permute.xlu0 %1711
      %1713 = vrot.lane.b32.xlu0 %v716, 96
      %v1714 = vpop.permute.xlu0 %1713
      %1723 = vrot.lane.b32.xlu0 %v674, 64
      %v1724 = vpop.permute.xlu0 %1723
      %1725 = vrot.lane.b32.xlu0 %v680, 64
      %v1726 = vpop.permute.xlu0 %1725
      %1727 = vrot.lane.b32.xlu0 %v686, 64
      %v1728 = vpop.permute.xlu0 %1727
      %1729 = vrot.lane.b32.xlu0 %v692, 64
      %v1730 = vpop.permute.xlu0 %1729
      %1731 = vrot.lane.b32.xlu0 %v698, 64
      %v1732 = vpop.permute.xlu0 %1731
      %1733 = vrot.lane.b32.xlu0 %v704, 64
      %v1734 = vpop.permute.xlu0 %1733
      %1735 = vrot.lane.b32.xlu0 %v710, 64
      %v1736 = vpop.permute.xlu0 %1735
      %1737 = vrot.lane.b32.xlu0 %v716, 64
      %v1738 = vpop.permute.xlu0 %1737
      %1747 = vrot.lane.b32.xlu0 %v674, 32
      %v1748 = vpop.permute.xlu0 %1747
      %1749 = vrot.lane.b32.xlu0 %v680, 32
      %v1750 = vpop.permute.xlu0 %1749
      %1751 = vrot.lane.b32.xlu0 %v686, 32
      %v1752 = vpop.permute.xlu0 %1751
      %1753 = vrot.lane.b32.xlu0 %v692, 32
      %v1754 = vpop.permute.xlu0 %1753
      %1755 = vrot.lane.b32.xlu0 %v698, 32
      %v1756 = vpop.permute.xlu0 %1755
      %1757 = vrot.lane.b32.xlu0 %v704, 32
      %v1758 = vpop.permute.xlu0 %1757
      %1759 = vrot.lane.b32.xlu0 %v710, 32
      %v1760 = vpop.permute.xlu0 %1759
      %1761 = vrot.lane.b32.xlu0 %v716, 32
      %v1762 = vpop.permute.xlu0 %1761
      %v1771 = vld [vmem:[%s5] sm:$0x1]
      %v1773 = vlaneseq
      %v1774 = vshrl.u32 %v1773, 7
      %v1775 = vsub.s32 0, %v1774
      %v1776 = vrot.slane %v1771, %v1775
      %1778 = vmatprep.subr.mxu0 0.0
      %1779 = vmatpush1.msra.mxu0 %v674
      %1780 = vmatprep.subr.mxu0 0.0
      %1781 = vmatpush1.msra.mxu0 %v680
      %1782 = vmatprep.subr.mxu0 0.0
      %1783 = vmatpush1.msra.mxu0 %v686
      %1784 = vmatprep.subr.mxu0 0.0
      %1785 = vmatpush1.msra.mxu0 %v692
      %1786 = vmatprep.subr.mxu0 0.0
      %1787 = vmatpush1.msra.mxu0 %v698
      %1788 = vmatprep.subr.mxu0 0.0
      %1789 = vmatpush1.msra.mxu0 %v704
      %1790 = vmatprep.subr.mxu0 0.0
      %1791 = vmatpush1.msra.mxu0 %v710
      %1792 = vmatprep.subr.mxu0 0.0
      %1793 = vmatpush1.msra.mxu0 %v716
      %1794 = vmatprep.subr.mxu0 0.0
      %1795 = vmatpush1.msra.mxu0 %v1700
      %1796 = vmatprep.subr.mxu0 0.0
      %1797 = vmatpush1.msra.mxu0 %v1702
      %1798 = vmatprep.subr.mxu0 0.0
      %1799 = vmatpush1.msra.mxu0 %v1704
      %1800 = vmatprep.subr.mxu0 0.0
      %1801 = vmatpush1.msra.mxu0 %v1706
      %1802 = vmatprep.subr.mxu0 0.0
      %1803 = vmatpush1.msra.mxu0 %v1708
      %1804 = vmatprep.subr.mxu0 0.0
      %1805 = vmatpush1.msra.mxu0 %v1710
      %1806 = vmatprep.subr.mxu0 0.0
      %1807 = vmatpush1.msra.mxu0 %v1712
      %1808 = vmatprep.subr.mxu0 0.0
      %1809 = vmatpush1.msra.mxu0 %v1714
      %1810 = vmatprep.subr.mxu0 0.0
      %1811 = vmatpush1.msra.mxu0 %v1724
      %1812 = vmatprep.subr.mxu0 0.0
      %1813 = vmatpush1.msra.mxu0 %v1726
      %1814 = vmatprep.subr.mxu0 0.0
      %1815 = vmatpush1.msra.mxu0 %v1728
      %1816 = vmatprep.subr.mxu0 0.0
      %1817 = vmatpush1.msra.mxu0 %v1730
      %1818 = vmatprep.subr.mxu0 0.0
      %1819 = vmatpush1.msra.mxu0 %v1732
      %1820 = vmatprep.subr.mxu0 0.0
      %1821 = vmatpush1.msra.mxu0 %v1734
      %1822 = vmatprep.subr.mxu0 0.0
      %1823 = vmatpush1.msra.mxu0 %v1736
      %1824 = vmatprep.subr.mxu0 0.0
      %1825 = vmatpush1.msra.mxu0 %v1738
      %1826 = vmatprep.subr.mxu0 0.0
      %1827 = vmatpush1.msra.mxu0 %v1748
      %1828 = vmatprep.subr.mxu0 0.0
      %1829 = vmatpush1.msra.mxu0 %v1750
      %1830 = vmatprep.subr.mxu0 0.0
      %1831 = vmatpush1.msra.mxu0 %v1752
      %1832 = vmatprep.subr.mxu0 0.0
      %1833 = vmatpush1.msra.mxu0 %v1754
      %1834 = vmatprep.subr.mxu0 0.0
      %1835 = vmatpush1.msra.mxu0 %v1756
      %1836 = vmatprep.subr.mxu0 0.0
      %1837 = vmatpush1.msra.mxu0 %v1758
      %1838 = vmatprep.subr.mxu0 0.0
      %1839 = vmatpush1.msra.mxu0 %v1760
      %1840 = vmatprep.subr.mxu0 0.0
      %1841 = vmatpush1.msra.mxu0 %v1762
      %1842 = vmatprep.mubr.f32.mxu0 %v1683
      %1843 = vmatmul.mubr.f32.gmra.mrb[0].mxu0 %v1675
      %v1844 = vpop.f32.mrb[0].mxu0
      %v1845 = vadd.f32 %v1776, %v1844
      %v1846 = vpop.f32.mrb[0].mxu0
      %1847 = vmatprep.mubr.f32.mxu0 %v1684
      %1848 = vmatmul.mubr.f32.gmra.mrb[0].mxu0 %v1676
      %v1849 = vpop.f32.mrb[0].mxu0
      %v1850 = vadd.f32 %v1776, %v1849
      %v1851 = vpop.f32.mrb[0].mxu0
      %1852 = vmatprep.mubr.f32.mxu0 %v1685
      %1853 = vmatmul.mubr.f32.gmra.mrb[0].mxu0 %v1677
      %v1854 = vpop.f32.mrb[0].mxu0
      %v1855 = vadd.f32 %v1776, %v1854
      %v1856 = vpop.f32.mrb[0].mxu0
      %1857 = vmatprep.mubr.f32.mxu0 %v1686
      %1858 = vmatmul.mubr.f32.gmra.mrb[0].mxu0 %v1678
      %v1859 = vpop.f32.mrb[0].mxu0
      %v1860 = vadd.f32 %v1776, %v1859
      %v1861 = vpop.f32.mrb[0].mxu0
      %1862 = vmatprep.mubr.f32.mxu0 %v1687
      %1863 = vmatmul.mubr.f32.gmra.mrb[0].mxu0 %v1679
      %v1864 = vpop.f32.mrb[0].mxu0
      %v1865 = vadd.f32 %v1776, %v1864
      %v1866 = vpop.f32.mrb[0].mxu0
      %1867 = vmatprep.mubr.f32.mxu0 %v1688
      %1868 = vmatmul.mubr.f32.gmra.mrb[0].mxu0 %v1680
      %v1869 = vpop.f32.mrb[0].mxu0
      %v1870 = vadd.f32 %v1776, %v1869
      %v1871 = vpop.f32.mrb[0].mxu0
      %1872 = vmatprep.mubr.f32.mxu0 %v1689
      %1873 = vmatmul.mubr.f32.gmra.mrb[0].mxu0 %v1681
      %v1874 = vpop.f32.mrb[0].mxu0
      %v1875 = vadd.f32 %v1776, %v1874
      %v1876 = vpop.f32.mrb[0].mxu0
      %1877 = vmatprep.mubr.f32.mxu0 %v1690
      %1878 = vmatmul.mubr.f32.gmra.mrb[0].mxu0 %v1682
      %v1879 = vpop.f32.mrb[0].mxu0
      %v1880 = vadd.f32 %v1776, %v1879
      %v1881 = vpop.f32.mrb[0].mxu0
      %1882 = vdwg.mxu0
      %v1883 = vadd.f32 %v1845, %v417
      %v1884 = vadd.f32 %v1850, %v418
      %v1885 = vadd.f32 %v1855, %v419
      %v1886 = vadd.f32 %v1860, %v420
      %v1887 = vadd.f32 %v1865, %v421
      %v1888 = vadd.f32 %v1870, %v422
      %v1889 = vadd.f32 %v1875, %v423
      %v1890 = vadd.f32 %v1880, %v424
      %v1891 = vld [vmem:[%s6] sm:$0x1]
      %v1892 = vld [vmem:[%s7] sm:$0x1]
      %v1893 = vsel %vm427, %v1883, 0.0
      %1894 = vadd.xlane.f32.xlu0 %v1893
      %v1895 = vpop.xlane.xlu0 %1894
      %v1896 = vsel %vm427, %v1884, 0.0
      %1897 = vadd.xlane.f32.xlu0 %v1896
      %v1898 = vpop.xlane.xlu0 %1897
      %v1899 = vsel %vm427, %v1885, 0.0
      %1900 = vadd.xlane.f32.xlu0 %v1899
      %v1901 = vpop.xlane.xlu0 %1900
      %v1902 = vsel %vm427, %v1886, 0.0
      %1903 = vadd.xlane.f32.xlu0 %v1902
      %v1904 = vpop.xlane.xlu0 %1903
      %v1905 = vsel %vm427, %v1887, 0.0
      %1906 = vadd.xlane.f32.xlu0 %v1905
      %v1907 = vpop.xlane.xlu0 %1906
      %v1908 = vsel %vm427, %v1888, 0.0
      %1909 = vadd.xlane.f32.xlu0 %v1908
      %v1910 = vpop.xlane.xlu0 %1909
      %v1911 = vsel %vm427, %v1889, 0.0
      %1912 = vadd.xlane.f32.xlu0 %v1911
      %v1913 = vpop.xlane.xlu0 %1912
      %v1914 = vsel %vm427, %v1890, 0.0
      %1915 = vadd.xlane.f32.xlu0 %v1914
      %v1916 = vpop.xlane.xlu0 %1915
      %v1917 = vmul.f32 %v1895, %v452
      %v1918 = vmul.f32 %v1898, %v452
      %v1919 = vmul.f32 %v1901, %v452
      %v1920 = vmul.f32 %v1904, %v452
      %v1921 = vmul.f32 %v1907, %v452
      %v1922 = vmul.f32 %v1910, %v452
      %v1923 = vmul.f32 %v1913, %v452
      %v1924 = vmul.f32 %v1916, %v452
      %v1925 = vsub.f32 %v1883, %v1917
      %v1926 = vsub.f32 %v1884, %v1918
      %v1927 = vsub.f32 %v1885, %v1919
      %v1928 = vsub.f32 %v1886, %v1920
      %v1929 = vsub.f32 %v1887, %v1921
      %v1930 = vsub.f32 %v1888, %v1922
      %v1931 = vsub.f32 %v1889, %v1923
      %v1932 = vsub.f32 %v1890, %v1924
      %v1933 = vmul.f32 %v1925, %v1925
      %v1934 = vmul.f32 %v1926, %v1926
      %v1935 = vmul.f32 %v1927, %v1927
      %v1936 = vmul.f32 %v1928, %v1928
      %v1937 = vmul.f32 %v1929, %v1929
      %v1938 = vmul.f32 %v1930, %v1930
      %v1939 = vmul.f32 %v1931, %v1931
      %v1940 = vmul.f32 %v1932, %v1932
      %v1941 = vsel %vm427, %v1933, 0.0
      %1942 = vadd.xlane.f32.xlu0 %v1941
      %v1943 = vpop.xlane.xlu0 %1942
      %v1944 = vsel %vm427, %v1934, 0.0
      %1945 = vadd.xlane.f32.xlu0 %v1944
      %v1946 = vpop.xlane.xlu0 %1945
      %v1947 = vsel %vm427, %v1935, 0.0
      %1948 = vadd.xlane.f32.xlu0 %v1947
      %v1949 = vpop.xlane.xlu0 %1948
      %v1950 = vsel %vm427, %v1936, 0.0
      %1951 = vadd.xlane.f32.xlu0 %v1950
      %v1952 = vpop.xlane.xlu0 %1951
      %v1953 = vsel %vm427, %v1937, 0.0
      %1954 = vadd.xlane.f32.xlu0 %v1953
      %v1955 = vpop.xlane.xlu0 %1954
      %v1956 = vsel %vm427, %v1938, 0.0
      %1957 = vadd.xlane.f32.xlu0 %v1956
      %v1958 = vpop.xlane.xlu0 %1957
      %v1959 = vsel %vm427, %v1939, 0.0
      %1960 = vadd.xlane.f32.xlu0 %v1959
      %v1961 = vpop.xlane.xlu0 %1960
      %v1962 = vsel %vm427, %v1940, 0.0
      %1963 = vadd.xlane.f32.xlu0 %v1962
      %v1964 = vpop.xlane.xlu0 %1963
      %v1965 = vmul.f32 %v1943, %v452
      %v1966 = vmul.f32 %v1946, %v452
      %v1967 = vmul.f32 %v1949, %v452
      %v1968 = vmul.f32 %v1952, %v452
      %v1969 = vmul.f32 %v1955, %v452
      %v1970 = vmul.f32 %v1958, %v452
      %v1971 = vmul.f32 %v1961, %v452
      %v1972 = vmul.f32 %v1964, %v452
      %v1973 = vadd.f32 %v1965, 1e-05
      %v1974 = vadd.f32 %v1966, 1e-05
      %v1975 = vadd.f32 %v1967, 1e-05
      %v1976 = vadd.f32 %v1968, 1e-05
      %v1977 = vadd.f32 %v1969, 1e-05
      %v1978 = vadd.f32 %v1970, 1e-05
      %v1979 = vadd.f32 %v1971, 1e-05
      %v1980 = vadd.f32 %v1972, 1e-05
      %v1981 = vrsqrt.pop %v1973
      %v1982 = vrsqrt.pop %v1974
      %v1983 = vrsqrt.pop %v1975
      %v1984 = vrsqrt.pop %v1976
      %v1985 = vrsqrt.pop %v1977
      %v1986 = vrsqrt.pop %v1978
      %v1987 = vrsqrt.pop %v1979
      %v1988 = vrsqrt.pop %v1980
      %v1989 = vmul.f32 %v1925, %v1981
      %v1990 = vmul.f32 %v1926, %v1982
      %v1991 = vmul.f32 %v1927, %v1983
      %v1992 = vmul.f32 %v1928, %v1984
      %v1993 = vmul.f32 %v1929, %v1985
      %v1994 = vmul.f32 %v1930, %v1986
      %v1995 = vmul.f32 %v1931, %v1987
      %v1996 = vmul.f32 %v1932, %v1988
      %v1998 = vlaneseq
      %v1999 = vshrl.u32 %v1998, 7
      %v2000 = vsub.s32 0, %v1999
      %v2001 = vrot.slane %v1891, %v2000
      %v2003 = vmul.f32 %v1989, %v2001
      %v2004 = vmul.f32 %v1990, %v2001
      %v2005 = vmul.f32 %v1991, %v2001
      %v2006 = vmul.f32 %v1992, %v2001
      %v2007 = vmul.f32 %v1993, %v2001
      %v2008 = vmul.f32 %v1994, %v2001
      %v2009 = vmul.f32 %v1995, %v2001
      %v2010 = vmul.f32 %v1996, %v2001
      %v2012 = vlaneseq
      %v2013 = vshrl.u32 %v2012, 7
      %v2014 = vsub.s32 0, %v2013
      %v2015 = vrot.slane %v1892, %v2014
      %v2017 = vadd.f32 %v2003, %v2015
      %v2018 = vadd.f32 %v2004, %v2015
      %v2019 = vadd.f32 %v2005, %v2015
      %v2020 = vadd.f32 %v2006, %v2015
      %v2021 = vadd.f32 %v2007, %v2015
      %v2022 = vadd.f32 %v2008, %v2015
      %v2023 = vadd.f32 %v2009, %v2015
      %v2024 = vadd.f32 %v2010, %v2015
      %v2025 = vld [vmem:[%s8] sm:$0xff]
      %v2026 = vld [vmem:[%s8 + $0x8] sm:$0xff]
      %v2027 = vld [vmem:[%s8 + $0x10] sm:$0xff]
      %v2028 = vld [vmem:[%s8 + $0x18] sm:$0xff]
      %v2029 = vld [vmem:[%s9] sm:$0x1]
      %v2031 = vlaneseq
      %v2032 = vshrl.u32 %v2031, 7
      %v2033 = vsub.s32 0, %v2032
      %v2034 = vrot.slane %v2029, %v2033
      %v2037 = vsel %vm427, %v2017, 0
      %v2040 = vsel %vm427, %v2018, 0
      %v2043 = vsel %vm427, %v2019, 0
      %v2046 = vsel %vm427, %v2020, 0
      %v2049 = vsel %vm427, %v2021, 0
      %v2052 = vsel %vm427, %v2022, 0
      %v2055 = vsel %vm427, %v2023, 0
      %v2058 = vsel %vm427, %v2024, 0
      %2060 = vmatprep.subr.mxu0 0.0
      %2061 = vmatpush1.msra.mxu0 %v2025
      %2062 = vmatprep.subr.mxu0 0.0
      %2063 = vmatpush1.msra.mxu0 %v2026
      %2064 = vmatprep.subr.mxu0 0.0
      %2065 = vmatpush1.msra.mxu0 %v2027
      %2066 = vmatprep.subr.mxu0 0.0
      %2067 = vmatpush1.msra.mxu0 %v2028
      %2068 = vmatprep.subr.mxu0 0.0
      %2069 = vmatpush1.msra.mxu0 0.0
      %2070 = vmatprep.subr.mxu0 0.0
      %2071 = vmatpush1.msra.mxu0 0.0
      %2072 = vmatprep.subr.mxu0 0.0
      %2073 = vmatpush1.msra.mxu0 0.0
      %2074 = vmatprep.subr.mxu0 0.0
      %2075 = vmatpush1.msra.mxu0 0.0
      %2076 = vmatprep.subr.mxu0 0.0
      %2077 = vmatpush1.msra.mxu0 0.0
      %2078 = vmatprep.subr.mxu0 0.0
      %2079 = vmatpush1.msra.mxu0 0.0
      %2080 = vmatprep.subr.mxu0 0.0
      %2081 = vmatpush1.msra.mxu0 0.0
      %2082 = vmatprep.subr.mxu0 0.0
      %2083 = vmatpush1.msra.mxu0 0.0
      %2084 = vmatprep.subr.mxu0 0.0
      %2085 = vmatpush1.msra.mxu0 0.0
      %2086 = vmatprep.subr.mxu0 0.0
      %2087 = vmatpush1.msra.mxu0 0.0
      %2088 = vmatprep.subr.mxu0 0.0
      %2089 = vmatpush1.msra.mxu0 0.0
      %2090 = vmatprep.subr.mxu0 0.0
      %2091 = vmatpush1.msra.mxu0 0.0
      %2092 = vmatprep.subr.mxu0 0.0
      %2093 = vmatpush1.msra.mxu0 0.0
      %2094 = vmatprep.subr.mxu0 0.0
      %2095 = vmatpush1.msra.mxu0 0.0
      %2096 = vmatprep.subr.mxu0 0.0
      %2097 = vmatpush1.msra.mxu0 0.0
      %2098 = vmatprep.subr.mxu0 0.0
      %2099 = vmatpush1.msra.mxu0 0.0
      %2100 = vmatprep.subr.mxu0 0.0
      %2101 = vmatpush1.msra.mxu0 0.0
      %2102 = vmatprep.subr.mxu0 0.0
      %2103 = vmatpush1.msra.mxu0 0.0
      %2104 = vmatprep.subr.mxu0 0.0
      %2105 = vmatpush1.msra.mxu0 0.0
      %2106 = vmatprep.subr.mxu0 0.0
      %2107 = vmatpush1.msra.mxu0 0.0
      %2108 = vmatprep.subr.mxu0 0.0
      %2109 = vmatpush1.msra.mxu0 0.0
      %2110 = vmatprep.subr.mxu0 0.0
      %2111 = vmatpush1.msra.mxu0 0.0
      %2112 = vmatprep.subr.mxu0 0.0
      %2113 = vmatpush1.msra.mxu0 0.0
      %2114 = vmatprep.subr.mxu0 0.0
      %2115 = vmatpush1.msra.mxu0 0.0
      %2116 = vmatprep.subr.mxu0 0.0
      %2117 = vmatpush1.msra.mxu0 0.0
      %2118 = vmatprep.subr.mxu0 0.0
      %2119 = vmatpush1.msra.mxu0 0.0
      %2120 = vmatprep.subr.mxu0 0.0
      %2121 = vmatpush1.msra.mxu0 0.0
      %2122 = vmatprep.subr.mxu0 0.0
      %2123 = vmatpush1.msra.mxu0 0.0
      %2124 = vmatprep.mubr.f32.mxu0 0.0
      %2125 = vmatmul.mubr.f32.gmra.mrb[0].mxu0 %v2037
      %v2126 = vpop.f32.mrb[0].mxu0
      %v2127 = vadd.f32 %v2034, %v2126
      %v2128 = vpop.f32.mrb[0].mxu0
      %2129 = vmatprep.mubr.f32.mxu0 0.0
      %2130 = vmatmul.mubr.f32.gmra.mrb[0].mxu0 %v2040
      %v2131 = vpop.f32.mrb[0].mxu0
      %v2132 = vadd.f32 %v2034, %v2131
      %v2133 = vpop.f32.mrb[0].mxu0
      %2134 = vmatprep.mubr.f32.mxu0 0.0
      %2135 = vmatmul.mubr.f32.gmra.mrb[0].mxu0 %v2043
      %v2136 = vpop.f32.mrb[0].mxu0
      %v2137 = vadd.f32 %v2034, %v2136
      %v2138 = vpop.f32.mrb[0].mxu0
      %2139 = vmatprep.mubr.f32.mxu0 0.0
      %2140 = vmatmul.mubr.f32.gmra.mrb[0].mxu0 %v2046
      %v2141 = vpop.f32.mrb[0].mxu0
      %v2142 = vadd.f32 %v2034, %v2141
      %v2143 = vpop.f32.mrb[0].mxu0
      %2144 = vmatprep.mubr.f32.mxu0 0.0
      %2145 = vmatmul.mubr.f32.gmra.mrb[0].mxu0 %v2049
      %v2146 = vpop.f32.mrb[0].mxu0
      %v2147 = vadd.f32 %v2034, %v2146
      %v2148 = vpop.f32.mrb[0].mxu0
      %2149 = vmatprep.mubr.f32.mxu0 0.0
      %2150 = vmatmul.mubr.f32.gmra.mrb[0].mxu0 %v2052
      %v2151 = vpop.f32.mrb[0].mxu0
      %v2152 = vadd.f32 %v2034, %v2151
      %v2153 = vpop.f32.mrb[0].mxu0
      %2154 = vmatprep.mubr.f32.mxu0 0.0
      %2155 = vmatmul.mubr.f32.gmra.mrb[0].mxu0 %v2055
      %v2156 = vpop.f32.mrb[0].mxu0
      %v2157 = vadd.f32 %v2034, %v2156
      %v2158 = vpop.f32.mrb[0].mxu0
      %2159 = vmatprep.mubr.f32.mxu0 0.0
      %2160 = vmatmul.mubr.f32.gmra.mrb[0].mxu0 %v2058
      %v2161 = vpop.f32.mrb[0].mxu0
      %v2162 = vadd.f32 %v2034, %v2161
      %v2163 = vpop.f32.mrb[0].mxu0
      %2164 = vdwg.mxu0
      %v2165 = vmul.f32 %v2127, 0.5
      %v2166 = vmul.f32 %v2132, 0.5
      %v2167 = vmul.f32 %v2137, 0.5
      %v2168 = vmul.f32 %v2142, 0.5
      %v2169 = vmul.f32 %v2147, 0.5
      %v2170 = vmul.f32 %v2152, 0.5
      %v2171 = vmul.f32 %v2157, 0.5
      %v2172 = vmul.f32 %v2162, 0.5
      %v2173 = vmul.f32 %v2127, 0.044715
      %v2174 = vmul.f32 %v2132, 0.044715
      %v2175 = vmul.f32 %v2137, 0.044715
      %v2176 = vmul.f32 %v2142, 0.044715
      %v2177 = vmul.f32 %v2147, 0.044715
      %v2178 = vmul.f32 %v2152, 0.044715
      %v2179 = vmul.f32 %v2157, 0.044715
      %v2180 = vmul.f32 %v2162, 0.044715
      %v2181 = vmul.f32 %v2173, %v2127
      %v2182 = vmul.f32 %v2174, %v2132
      %v2183 = vmul.f32 %v2175, %v2137
      %v2184 = vmul.f32 %v2176, %v2142
      %v2185 = vmul.f32 %v2177, %v2147
      %v2186 = vmul.f32 %v2178, %v2152
      %v2187 = vmul.f32 %v2179, %v2157
      %v2188 = vmul.f32 %v2180, %v2162
      %v2189 = vmul.f32 %v2181, %v2127
      %v2190 = vmul.f32 %v2182, %v2132
      %v2191 = vmul.f32 %v2183, %v2137
      %v2192 = vmul.f32 %v2184, %v2142
      %v2193 = vmul.f32 %v2185, %v2147
      %v2194 = vmul.f32 %v2186, %v2152
      %v2195 = vmul.f32 %v2187, %v2157
      %v2196 = vmul.f32 %v2188, %v2162
      %v2197 = vadd.f32 %v2127, %v2189
      %v2198 = vadd.f32 %v2132, %v2190
      %v2199 = vadd.f32 %v2137, %v2191
      %v2200 = vadd.f32 %v2142, %v2192
      %v2201 = vadd.f32 %v2147, %v2193
      %v2202 = vadd.f32 %v2152, %v2194
      %v2203 = vadd.f32 %v2157, %v2195
      %v2204 = vadd.f32 %v2162, %v2196
      %v2205 = vmul.f32 %v2197, 0.7978846
      %v2206 = vmul.f32 %v2198, 0.7978846
      %v2207 = vmul.f32 %v2199, 0.7978846
      %v2208 = vmul.f32 %v2200, 0.7978846
      %v2209 = vmul.f32 %v2201, 0.7978846
      %v2210 = vmul.f32 %v2202, 0.7978846
      %v2211 = vmul.f32 %v2203, 0.7978846
      %v2212 = vmul.f32 %v2204, 0.7978846
      %v2213 = vtanh.pop %v2205
      %v2214 = vtanh.pop %v2206
      %v2215 = vtanh.pop %v2207
      %v2216 = vtanh.pop %v2208
      %v2217 = vtanh.pop %v2209
      %v2218 = vtanh.pop %v2210
      %v2219 = vtanh.pop %v2211
      %v2220 = vtanh.pop %v2212
      %v2221 = vadd.f32 %v2213, 1.0
      %v2222 = vadd.f32 %v2214, 1.0
      %v2223 = vadd.f32 %v2215, 1.0
      %v2224 = vadd.f32 %v2216, 1.0
      %v2225 = vadd.f32 %v2217, 1.0
      %v2226 = vadd.f32 %v2218, 1.0
      %v2227 = vadd.f32 %v2219, 1.0
      %v2228 = vadd.f32 %v2220, 1.0
      %v2229 = vmul.f32 %v2165, %v2221
      %v2230 = vmul.f32 %v2166, %v2222
      %v2231 = vmul.f32 %v2167, %v2223
      %v2232 = vmul.f32 %v2168, %v2224
      %v2233 = vmul.f32 %v2169, %v2225
      %v2234 = vmul.f32 %v2170, %v2226
      %v2235 = vmul.f32 %v2171, %v2227
      %v2236 = vmul.f32 %v2172, %v2228
      %v2237 = vld [vmem:[%s10] sm:$0xff]
      %v2238 = vld [vmem:[%s10 + $0x8] sm:$0xff]
      %v2239 = vld [vmem:[%s10 + $0x10] sm:$0xff]
      %v2240 = vld [vmem:[%s10 + $0x18] sm:$0xff]
      %v2241 = vld [vmem:[%s11] sm:$0x1]
      %v2243 = vlaneseq
      %v2244 = vshrl.u32 %v2243, 7
      %v2245 = vsub.s32 0, %v2244
      %v2246 = vrot.slane %v2241, %v2245
      %v2249 = vsel %vm427, %v2229, 0
      %v2252 = vsel %vm427, %v2230, 0
      %v2255 = vsel %vm427, %v2231, 0
      %v2258 = vsel %vm427, %v2232, 0
      %v2261 = vsel %vm427, %v2233, 0
      %v2264 = vsel %vm427, %v2234, 0
      %v2267 = vsel %vm427, %v2235, 0
      %v2270 = vsel %vm427, %v2236, 0
      %2272 = vmatprep.subr.mxu0 0.0
      %2273 = vmatpush1.msra.mxu0 %v2237
      %2274 = vmatprep.subr.mxu0 0.0
      %2275 = vmatpush1.msra.mxu0 %v2238
      %2276 = vmatprep.subr.mxu0 0.0
      %2277 = vmatpush1.msra.mxu0 %v2239
      %2278 = vmatprep.subr.mxu0 0.0
      %2279 = vmatpush1.msra.mxu0 %v2240
      %2280 = vmatprep.subr.mxu0 0.0
      %2281 = vmatpush1.msra.mxu0 0.0
      %2282 = vmatprep.subr.mxu0 0.0
      %2283 = vmatpush1.msra.mxu0 0.0
      %2284 = vmatprep.subr.mxu0 0.0
      %2285 = vmatpush1.msra.mxu0 0.0
      %2286 = vmatprep.subr.mxu0 0.0
      %2287 = vmatpush1.msra.mxu0 0.0
      %2288 = vmatprep.subr.mxu0 0.0
      %2289 = vmatpush1.msra.mxu0 0.0
      %2290 = vmatprep.subr.mxu0 0.0
      %2291 = vmatpush1.msra.mxu0 0.0
      %2292 = vmatprep.subr.mxu0 0.0
      %2293 = vmatpush1.msra.mxu0 0.0
      %2294 = vmatprep.subr.mxu0 0.0
      %2295 = vmatpush1.msra.mxu0 0.0
      %2296 = vmatprep.subr.mxu0 0.0
      %2297 = vmatpush1.msra.mxu0 0.0
      %2298 = vmatprep.subr.mxu0 0.0
      %2299 = vmatpush1.msra.mxu0 0.0
      %2300 = vmatprep.subr.mxu0 0.0
      %2301 = vmatpush1.msra.mxu0 0.0
      %2302 = vmatprep.subr.mxu0 0.0
      %2303 = vmatpush1.msra.mxu0 0.0
      %2304 = vmatprep.subr.mxu0 0.0
      %2305 = vmatpush1.msra.mxu0 0.0
      %2306 = vmatprep.subr.mxu0 0.0
      %2307 = vmatpush1.msra.mxu0 0.0
      %2308 = vmatprep.subr.mxu0 0.0
      %2309 = vmatpush1.msra.mxu0 0.0
      %2310 = vmatprep.subr.mxu0 0.0
      %2311 = vmatpush1.msra.mxu0 0.0
      %2312 = vmatprep.subr.mxu0 0.0
      %2313 = vmatpush1.msra.mxu0 0.0
      %2314 = vmatprep.subr.mxu0 0.0
      %2315 = vmatpush1.msra.mxu0 0.0
      %2316 = vmatprep.subr.mxu0 0.0
      %2317 = vmatpush1.msra.mxu0 0.0
      %2318 = vmatprep.subr.mxu0 0.0
      %2319 = vmatpush1.msra.mxu0 0.0
      %2320 = vmatprep.subr.mxu0 0.0
      %2321 = vmatpush1.msra.mxu0 0.0
      %2322 = vmatprep.subr.mxu0 0.0
      %2323 = vmatpush1.msra.mxu0 0.0
      %2324 = vmatprep.subr.mxu0 0.0
      %2325 = vmatpush1.msra.mxu0 0.0
      %2326 = vmatprep.subr.mxu0 0.0
      %2327 = vmatpush1.msra.mxu0 0.0
      %2328 = vmatprep.subr.mxu0 0.0
      %2329 = vmatpush1.msra.mxu0 0.0
      %2330 = vmatprep.subr.mxu0 0.0
      %2331 = vmatpush1.msra.mxu0 0.0
      %2332 = vmatprep.subr.mxu0 0.0
      %2333 = vmatpush1.msra.mxu0 0.0
      %2334 = vmatprep.subr.mxu0 0.0
      %2335 = vmatpush1.msra.mxu0 0.0
      %2336 = vmatprep.mubr.f32.mxu0 0.0
      %2337 = vmatmul.mubr.f32.gmra.mrb[0].mxu0 %v2249
      %v2338 = vpop.f32.mrb[0].mxu0
      %v2339 = vadd.f32 %v2246, %v2338
      %v2340 = vpop.f32.mrb[0].mxu0
      %2341 = vmatprep.mubr.f32.mxu0 0.0
      %2342 = vmatmul.mubr.f32.gmra.mrb[0].mxu0 %v2252
      %v2343 = vpop.f32.mrb[0].mxu0
      %v2344 = vadd.f32 %v2246, %v2343
      %v2345 = vpop.f32.mrb[0].mxu0
      %2346 = vmatprep.mubr.f32.mxu0 0.0
      %2347 = vmatmul.mubr.f32.gmra.mrb[0].mxu0 %v2255
      %v2348 = vpop.f32.mrb[0].mxu0
      %v2349 = vadd.f32 %v2246, %v2348
      %v2350 = vpop.f32.mrb[0].mxu0
      %2351 = vmatprep.mubr.f32.mxu0 0.0
      %2352 = vmatmul.mubr.f32.gmra.mrb[0].mxu0 %v2258
      %v2353 = vpop.f32.mrb[0].mxu0
      %v2354 = vadd.f32 %v2246, %v2353
      %v2355 = vpop.f32.mrb[0].mxu0
      %2356 = vmatprep.mubr.f32.mxu0 0.0
      %2357 = vmatmul.mubr.f32.gmra.mrb[0].mxu0 %v2261
      %v2358 = vpop.f32.mrb[0].mxu0
      %v2359 = vadd.f32 %v2246, %v2358
      %v2360 = vpop.f32.mrb[0].mxu0
      %2361 = vmatprep.mubr.f32.mxu0 0.0
      %2362 = vmatmul.mubr.f32.gmra.mrb[0].mxu0 %v2264
      %v2363 = vpop.f32.mrb[0].mxu0
      %v2364 = vadd.f32 %v2246, %v2363
      %v2365 = vpop.f32.mrb[0].mxu0
      %2366 = vmatprep.mubr.f32.mxu0 0.0
      %2367 = vmatmul.mubr.f32.gmra.mrb[0].mxu0 %v2267
      %v2368 = vpop.f32.mrb[0].mxu0
      %v2369 = vadd.f32 %v2246, %v2368
      %v2370 = vpop.f32.mrb[0].mxu0
      %2371 = vmatprep.mubr.f32.mxu0 0.0
      %2372 = vmatmul.mubr.f32.gmra.mrb[0].mxu0 %v2270
      %v2373 = vpop.f32.mrb[0].mxu0
      %v2374 = vadd.f32 %v2246, %v2373
      %v2375 = vpop.f32.mrb[0].mxu0
      %2376 = vdwg.mxu0
      %v2377 = vadd.f32 %v2339, %v1883
      %v2378 = vadd.f32 %v2344, %v1884
      %v2379 = vadd.f32 %v2349, %v1885
      %v2380 = vadd.f32 %v2354, %v1886
      %v2381 = vadd.f32 %v2359, %v1887
      %v2382 = vadd.f32 %v2364, %v1888
      %v2383 = vadd.f32 %v2369, %v1889
      %v2384 = vadd.f32 %v2374, %v1890
      %2385 = vst.msk [vmem:[%s415] sm:$0xff] %vm427, %v2377
      %2386 = vst.msk [vmem:[%s415 + $0x8] sm:$0xff] %vm427, %v2378
      %2387 = vst.msk [vmem:[%s415 + $0x10] sm:$0xff] %vm427, %v2379
      %2388 = vst.msk [vmem:[%s415 + $0x18] sm:$0xff] %vm427, %v2380
      %2389 = vst.msk [vmem:[%s415 + $0x20] sm:$0xff] %vm427, %v2381
      %2390 = vst.msk [vmem:[%s415 + $0x28] sm:$0xff] %vm427, %v2382
      %2391 = vst.msk [vmem:[%s415 + $0x30] sm:$0xff] %vm427, %v2383
      %2392 = vst.msk [vmem:[%s415 + $0x38] sm:$0xff] %vm427, %v2384
      %s2393 = smul.u32 8, %s23
      %p2394 = scmp.lt.s32.totalorder %s2393, 15
      %s2395 = scalar_select %p2394, %s2393, 15
      %s2396 = smul.addr %s2395, 8
      %s2397 = scalar_lea.vmem %s12, %s2396
      // Predicated region
      $region69: #{tpu_custom_call.1} parent=67 // pred_check
        %p2398 = pneg %p298
      $region70: #{tpu_custom_call.1} parent=67 // pred_check_branch
        %2400 = sbr.rel (%p2398) target = $region72
      $region71: #{tpu_custom_call.1} parent=67 // pred_region
        %s2401 = smul.u32 8, %s23
      $region72: #{tpu_custom_call.1} parent=67 // pred_fallthru
        _
    $region68: #{tpu_custom_call.1} parent=5 // pred_fallthru
      _
    %p2402 = scmp.le.s32.totalorder 2, %s18
    // Predicated region
    $region73: #{tpu_custom_call.1} parent=5 // pred_check
      %p2403 = pneg %p2402
    $region74: #{tpu_custom_call.1} parent=5 // pred_check_branch
      %2405 = sbr.rel (%p2403) target = $region76
    $region75: #{tpu_custom_call.1} parent=5 // pred_region
      %s2406 = ssub.s32 %s18, 2
      // Predicated region
      $region77: #{tpu_custom_call.1} parent=75 // pred_check
        %p2407 = pneg %p304
      $region78: #{tpu_custom_call.1} parent=75 // pred_check_branch
        %2409 = sbr.rel (%p2407) target = $region80
      $region79: #{tpu_custom_call.1} parent=75 // pred_region
        %s2410 = smul.u32 8, %s24
        %p2411 = scmp.lt.s32.totalorder %s2410, 15
        %s2412 = scalar_select %p2411, %s2410, 15
        %s2413 = smul.addr %s2412, 8
        %s2414 = scalar_lea.vmem %s12, %s2413
      $region80: #{tpu_custom_call.1} parent=75 // pred_fallthru
        _
    $region76: #{tpu_custom_call.1} parent=5 // pred_fallthru
      _
  $region6: #{tpu_custom_call.1} parent=0 // loop_footer
    %s22 = sadd.s32 1, %s18
  $region7: #{tpu_custom_call.1} parent=0 // loop_footer_branch
    %17 = sbr.rel target = $region3
  $region8: #{tpu_custom_call.1} parent=0 // loop_exit
    _

</llo_original>
